<compile_context>
chip_gen: v5e
topology: v5e:2x2
jax: 0.10.0
libtpu: 0.0.40
codegen_flags: <defaults>
</compile_context>

<pallas_src>
import functools

import jax
import jax.numpy as jnp
from jax import lax
from jax.scipy.linalg import block_diag
from jax.experimental import pallas as pl
from jax.experimental.pallas import tpu as pltpu

DCOEFF_FEASIBLE_RANGE = (0.005, 0.2)

CONFIG = {
    'dim_x': 16, 'dim_t': 8,
    'dim_z_aux1': 4, 'dim_z_aux2': 4,
    'activation': 'relu',
    'no_phy': False,
    'x_lnvar': -2.0,
    'range_dcoeff': [0.005, 0.2],
    'dx': 0.1, 'dt': 0.05, 'intg_lev': 2, 'ode_solver': 'euler',
    'arch_feat': 'mlp', 'num_units_feat': 32,
    'hidlayers_feat': [32],
    'hidlayers_aux1_enc': [32], 'hidlayers_aux2_enc': [32],
    'hidlayers_aux1_dec': [32], 'hidlayers_aux2_dec': [32],
    'hidlayers_unmixer': [32], 'hidlayers_dcoeff': [32],
}

EPS_W = 16  # lanes of the eps input: [eps_dcoeff | eps_z1 | eps_z2 | zero pad]


def _round_up(v, m):
    return (v + m - 1) // m * m


# ------------------------------------------------------------------------------------
# Fused kernel: encoder -> stats -> draw -> Euler ODE -> decode tail.
#   flat_ref : (TB, 128)   x flattened as x*dim_t + t
#   eps_ref  : (TB, 16)    reparameterization noise (zeros => hard_z=True)
#   w_ref    : (W_ROWS,128) packed weight slab (static row offsets in `offs`)
#   xout_ref : (TB, 128)   x_PAB flat (lane-dense)
#   stats_ref: (TB, 128)   [z1m|z1l|z2m|z2l | dc_mean dc_lnvar | 0...] (lane-dense)
# ------------------------------------------------------------------------------------
def _vae_kernel(flat_ref, eps_ref, w_ref, xout_ref, stats_ref, *, offs, dza1, dza2,
                dim_x, dim_t, intg_lev, dt_intg, inv_dx2, dc_lo, dc_hi):
    f32 = jnp.float32
    dim_y = dim_x

    def W(name):
        off, rows = offs[name]
        return w_ref[off:off + rows, :]

    def mm(a, b):
        return jnp.dot(a, b, preferred_element_type=f32)

    def relu(v):
        return jnp.maximum(v, 0.0)

    flat = flat_ref[...]                                            # (TB, 128)
    eps = eps_ref[...]                                              # (TB, 16)

    # ------------------------------ encoder ------------------------------
    h = relu(mm(flat, W('wf1')) + W('bf1'))                         # feat_aux1|feat_aux2 hidden
    feat12 = relu(mm(h, W('wf2')) + W('bf2'))                       # [feat1 | feat2] (relu output)
    hzen = relu(mm(feat12, W('wz1')) + W('bz1'))                    # z heads hidden (block diag)
    z_out = mm(hzen, W('wz2')) + W('bz2')                           # lanes 0:16 = [z1m|z1l|z2m|z2l]

    # unmixer: kron(Wu, I_T) matmul + residual MLP of [z1_mean, z2_mean] (means, pre-draw)
    hr = relu(mm(z_out, W('wr1')) + W('br1'))
    unmixed = mm(flat, W('wu')) + mm(hr, W('wr2')) + W('bumix')     # (TB, dim_y*dim_t)

    hp = relu(mm(unmixed, W('wp1')) + W('bp1'))
    featp = relu(mm(hp, W('wp2')) + W('bp2'))                       # feat_phy (relu output)
    hd = relu(mm(featp, W('wd1')) + W('bd1'))
    dc = mm(hd, W('wd2')) + W('bd2')                                # lanes zl:zl+2 = [mean_pre, lnvar]

    zl = 2 * (dza1 + dza2)
    lane = lax.broadcasted_iota(jnp.int32, dc.shape, 1)
    dc = jnp.where(lane == zl, jnp.logaddexp(dc, 0.0), dc)          # Softplus on the mean lane only
    stats = z_out + dc                                              # lane-dense stats slab
    stats_ref[...] = stats

    # --------------------- draw (reparameterized) + clip ---------------------
    dc_mean = dc[:, zl:zl + 1]
    dc_lnvar = dc[:, zl + 1:zl + 2]
    z1m = z_out[:, 0:dza1]
    z1l = z_out[:, dza1:2 * dza1]
    z2m = z_out[:, 2 * dza1:2 * dza1 + dza2]
    z2l = z_out[:, 2 * dza1 + dza2:zl]

    dcoeff = dc_mean + jnp.exp(0.5 * dc_lnvar) * eps[:, 0:1]
    dcoeff = jnp.clip(dcoeff, dc_lo, dc_hi)
    z1 = z1m + jnp.exp(0.5 * z1l) * eps[:, 1:1 + dza1]
    z2 = z2m + jnp.exp(0.5 * z2l) * eps[:, 1 + dza1:1 + dza1 + dza2]

    parts = [dcoeff, z1, z2]
    npad = EPS_W - (1 + dza1 + dza2)
    if npad > 0:
        parts.append(jnp.zeros((flat.shape[0], npad), f32))
    s16 = jnp.concatenate(parts, axis=1)                            # (TB, 16) = [dcoeff|z1|z2|0]

    # ----------------------- decoder: loop-invariant prologue -----------------------
    hz = mm(s16, W('w1z'))                      # z_aux1 @ W1z, pre-shifted to lanes 16:48
    hq = relu(mm(s16, W('wq1')) + W('bq1'))
    acc = mm(hq, W('wq2')) + W('bq2bm')         # aux2_res([dcoeff,z1,z2]) + bq2 + repeated bm
    d = dcoeff * (inv_dx2 * dt_intg)            # dcoeff*dt/dx^2 folded once, (TB,1)
    y = mm(flat, W('sinit'))                    # init_y = x[:, :, 0] at lanes 0:dim_y, rest 0
    wcomb = W('wcomb')                          # rows 0:16: [Laplacian | W1y]
    w2p = W('w2')                               # rows 16:48, cols 0:16 = dt*W2
    b2p = W('b2')                               # lanes 0:16 = dt*b2
    lane_y = lax.broadcasted_iota(jnp.int32, y.shape, 1)
    ymask = lane_y < dim_y
    sc_off = offs['sc'][0]

    # ------ fixed-step Euler (torchdiffeq 'euler' on the uniform t_intg grid), unrolled ------
    ys = []
    for tau in range(dim_t):
        ys.append(y[:, 0:dim_y])                # record subsampled state
        if tau == dim_t - 1:
            break
        for sub in range(intg_lev):
            step = tau * intg_lev + sub
            sc_row = w_ref[sc_off + step:sc_off + step + 1, :]      # sin(t)*w1s + cos(t)*w1c + b1
            full = mm(y, wcomb) + hz + sc_row   # lanes 0:16 = Lap(y); lanes 16:48 = aux1 pre-act
            y = y + d * jnp.where(ymask, full, 0.0) + mm(relu(full), w2p) + b2p

    # aux2_map over ALL recorded steps as one matmul against the pre-stacked M_big
    ystack = jnp.concatenate(ys, axis=1)                            # (TB, dim_t*dim_y) = (TB,128)
    xout_ref[...] = acc + mm(ystack, W('mbig'))


# ------------------------------------------------------------------------------------
# VAE.forward wrapper: pads the batch, runs the single fused pallas_call, slices stats.
# ------------------------------------------------------------------------------------
def vae_forward(wslab, x, eps, offs, cfg, reconstruct=True):
    dim_x = cfg['dim_x']
    dim_t = cfg['dim_t']
    dza1 = cfg['dim_z_aux1']
    dza2 = cfg['dim_z_aux2']
    feat = dim_x * dim_t

    x_ = x.reshape(-1, dim_x, dim_t).astype(jnp.float32)
    n = x_.shape[0]
    flat = x_.reshape(n, feat)
    eps = eps.astype(jnp.float32)

    tb = min(512, _round_up(max(n, 1), 8))      # batch tile (sized for v7x 64MiB VMEM headroom)
    n_pad = _round_up(n, tb)
    if n_pad != n:
        flat = jnp.pad(flat, ((0, n_pad - n), (0, 0)))
        eps = jnp.pad(eps, ((0, n_pad - n), (0, 0)))

    kernel = functools.partial(
        _vae_kernel, offs=offs, dza1=dza1, dza2=dza2, dim_x=dim_x, dim_t=dim_t,
        intg_lev=cfg['intg_lev'], dt_intg=cfg['dt'] / float(cfg['intg_lev']),
        inv_dx2=1.0 / (cfg['dx'] * cfg['dx']),
        dc_lo=DCOEFF_FEASIBLE_RANGE[0], dc_hi=DCOEFF_FEASIBLE_RANGE[1])

    xout, stats = pl.pallas_call(
        kernel,
        out_shape=(jax.ShapeDtypeStruct((n_pad, feat), jnp.float32),
                   jax.ShapeDtypeStruct((n_pad, feat), jnp.float32)),
        grid=(n_pad // tb,),
        in_specs=[pl.BlockSpec((tb, feat), lambda i: (i, 0)),
                  pl.BlockSpec((tb, EPS_W), lambda i: (i, 0)),
                  pl.BlockSpec((wslab.shape[0], feat), lambda i: (0, 0))],   # weights stay resident
        out_specs=(pl.BlockSpec((tb, feat), lambda i: (i, 0)),
                   pl.BlockSpec((tb, feat), lambda i: (i, 0))),
        compiler_params=pltpu.CompilerParams(dimension_semantics=("parallel",)),
    )(flat, eps, wslab)

    zl = 2 * (dza1 + dza2)
    stats = stats[:n]
    dcoeff_stat = {'mean': stats[:, zl:zl + 1], 'lnvar': stats[:, zl + 1:zl + 2]}
    z_aux1_stat = {'mean': stats[:, 0:dza1], 'lnvar': stats[:, dza1:2 * dza1]}
    z_aux2_stat = {'mean': stats[:, 2 * dza1:2 * dza1 + dza2], 'lnvar': stats[:, 2 * dza1 + dza2:zl]}
    if not reconstruct:
        return dcoeff_stat, z_aux1_stat, z_aux2_stat

    x_PAB = xout[:n].reshape(n, dim_x, dim_t)
    x_lnvar = jnp.ones((1,), jnp.float32) * cfg['x_lnvar']
    return dcoeff_stat, z_aux1_stat, z_aux2_stat, x_PAB, x_lnvar


def make_eps(n, dza1, dza2, hard_z, rng=None):
    """Reparameterization noise; zeros == torch draw(hard_z=True) (i.e. use the means)."""
    if hard_z:
        return jnp.zeros((n, EPS_W), jnp.float32)
    e = jax.random.normal(rng, (n, 1 + dza1 + dza2), jnp.float32)
    return jnp.pad(e, ((0, 0), (0, EPS_W - (1 + dza1 + dza2))))


# ------------------------------------------------------------------------------------
# One-time parameter packing: module-shaped params -> one contiguous (rows,128) slab.
# ------------------------------------------------------------------------------------
def pack_params(p, cfg):
    dim_x = cfg['dim_x']
    dim_y = dim_x
    dim_t = cfg['dim_t']
    dza1 = cfg['dim_z_aux1']
    dza2 = cfg['dim_z_aux2']
    feat = dim_x * dim_t
    f32 = jnp.float32

    assert cfg['activation'] == 'relu'
    assert cfg['arch_feat'] == 'mlp'
    assert cfg['ode_solver'] == 'euler'
    assert not cfg['no_phy']
    assert feat == 128 and dim_y * dim_t == 128, 'packing assumes a 128-lane flattened signal'
    assert 1 + dza1 + dza2 <= EPS_W and 2 * (dza1 + dza2) + 2 <= feat
    for k in ('feat_aux1', 'feat_aux2', 'z_aux1_mean', 'z_aux1_lnvar', 'z_aux2_mean',
              'z_aux2_lnvar', 'unmixer_res', 'feat_phy', 'dcoeff_mean', 'dcoeff_lnvar',
              'aux1_dec', 'aux2_res'):
        assert len(p[k]) == 2, 'packing assumes single-hidden-layer MLPs'

    pieces, offs = [], {}
    cursor = 0

    def add(name, content, read_rows=None):
        nonlocal cursor
        a = jnp.asarray(content, f32)
        if a.ndim == 1:
            a = a[None, :]
        rr = a.shape[0] if read_rows is None else read_rows
        region = _round_up(rr, 8)
        buf = jnp.zeros((region, feat), f32).at[:a.shape[0], :a.shape[1]].set(a)
        pieces.append(buf)
        offs[name] = (cursor, rr)
        cursor += region

    # ----------------------------- encoder -----------------------------
    (wf1a, bf1a), (wf1b, bf1b) = p['feat_aux1']
    (wf2a, bf2a), (wf2b, bf2b) = p['feat_aux2']
    add('wf1', jnp.concatenate([wf1a, wf2a], axis=1), read_rows=feat)
    add('bf1', jnp.concatenate([bf1a, bf2a]))
    add('wf2', block_diag(wf1b, wf2b), read_rows=feat)
    add('bf2', jnp.concatenate([bf1b, bf2b]))

    (wz1m_1, bz1m_1), (wz1m_2, bz1m_2) = p['z_aux1_mean']
    (wz1l_1, bz1l_1), (wz1l_2, bz1l_2) = p['z_aux1_lnvar']
    (wz2m_1, bz2m_1), (wz2m_2, bz2m_2) = p['z_aux2_mean']
    (wz2l_1, bz2l_1), (wz2l_2, bz2l_2) = p['z_aux2_lnvar']
    add('wz1', block_diag(jnp.concatenate([wz1m_1, wz1l_1], axis=1),
                          jnp.concatenate([wz2m_1, wz2l_1], axis=1)), read_rows=feat)
    add('bz1', jnp.concatenate([bz1m_1, bz1l_1, bz2m_1, bz2l_1]))
    add('wz2', block_diag(wz1m_2, wz1l_2, wz2m_2, wz2l_2), read_rows=feat)
    add('bz2', jnp.concatenate([bz1m_2, bz1l_2, bz2m_2, bz2l_2]))

    # unmixer_map as kron(Wu, I_T); unmixer_res routed from z_out MEAN lanes via zero rows
    wu, bu = p['unmixer_map']
    add('wu', jnp.kron(wu, jnp.eye(dim_t, dtype=f32)), read_rows=feat)
    (wr1, br1), (wr2, br2) = p['unmixer_res']
    hid_r = wr1.shape[1]
    wr1_big = jnp.zeros((feat, feat), f32)
    wr1_big = wr1_big.at[0:dza1, :hid_r].set(wr1[:dza1])
    wr1_big = wr1_big.at[2 * dza1:2 * dza1 + dza2, :hid_r].set(wr1[dza1:dza1 + dza2])
    add('wr1', wr1_big, read_rows=feat)
    add('br1', br1)
    add('wr2', wr2, read_rows=feat)
    add('bumix', jnp.repeat(bu, dim_t) + br2)       # unmixer_map bias (repeated) + res bias, merged

    (wp1, bp1), (wp2, bp2) = p['feat_phy']
    add('wp1', wp1, read_rows=feat)
    add('bp1', bp1)
    add('wp2', wp2, read_rows=feat)
    add('bp2', bp2)

    zl = 2 * (dza1 + dza2)
    (wdm1, bdm1), (wdm2, bdm2) = p['dcoeff_mean']
    (wdl1, bdl1), (wdl2, bdl2) = p['dcoeff_lnvar']
    add('wd1', jnp.concatenate([wdm1, wdl1], axis=1), read_rows=feat)
    add('bd1', jnp.concatenate([bdm1, bdl1]))
    wd2_nat = block_diag(wdm2, wdl2)
    wd2_big = jnp.zeros((feat, feat), f32).at[:wd2_nat.shape[0], zl:zl + 2].set(wd2_nat)
    add('wd2', wd2_big, read_rows=feat)             # dcoeff heads emitted at lanes zl, zl+1
    add('bd2', jnp.zeros((feat,), f32).at[zl].set(bdm2[0]).at[zl + 1].set(bdl2[0]))

    # ----------------------------- decoder -----------------------------
    (w1, b1), (w2, b2) = p['aux1_dec']              # Linear(dza1+dim_y+2 -> h), Linear(h -> dim_y)
    hid1 = w1.shape[1]
    w1z = w1[:dza1]
    w1y = w1[dza1:dza1 + dim_y]
    w1s = w1[dza1 + dim_y]
    w1c = w1[dza1 + dim_y + 1]
    intg_lev = cfg['intg_lev']
    dt_intg = cfg['dt'] / float(intg_lev)
    len_intg = (dim_t - 1) * intg_lev + 1
    t_intg = jnp.linspace(0.0, dt_intg * (len_intg - 1), len_intg).astype(f32)
    hz_off = dim_y                                  # aux1 hidden lives at lanes [dim_y : dim_y+hid1]

    # combined [Laplacian | W1y] (Laplacian == conv1d([1,-2,1], padding=1) as a tridiag matmul)
    lap = (jnp.diag(-2.0 * jnp.ones(dim_y)) + jnp.diag(jnp.ones(dim_y - 1), 1)
           + jnp.diag(jnp.ones(dim_y - 1), -1)).astype(f32)
    wcomb = jnp.zeros((feat, feat), f32)
    wcomb = wcomb.at[:dim_y, :dim_y].set(lap)
    wcomb = wcomb.at[:dim_y, hz_off:hz_off + hid1].set(w1y)
    add('wcomb', wcomb, read_rows=feat)

    # z_aux1 rows of aux1 layer-1, pre-shifted to the s16 layout and to lanes hz_off:hz_off+hid1
    w1z_s = jnp.zeros((EPS_W, feat), f32).at[1:1 + dza1, hz_off:hz_off + hid1].set(w1z)
    add('w1z', w1z_s, read_rows=EPS_W)

    # per-integration-step sin/cos rows + b1 (precomputed), at lanes hz_off:hz_off+hid1
    sc_nat = (jnp.sin(t_intg)[:, None] * w1s[None, :] + jnp.cos(t_intg)[:, None] * w1c[None, :]
              + b1[None, :])
    sc = jnp.zeros((_round_up(len_intg, 8), feat), f32).at[:len_intg, hz_off:hz_off + hid1].set(sc_nat)
    add('sc', sc, read_rows=sc.shape[0])

    # aux1 layer-2 and its bias with dt_intg folded in (Euler step absorbed)
    add('w2', jnp.zeros((feat, feat), f32).at[hz_off:hz_off + hid1, :dim_y].set(dt_intg * w2),
        read_rows=feat)
    add('b2', jnp.zeros((feat,), f32).at[:dim_y].set(dt_intg * b2))

    # init_y selector: flat[:, x*dim_t + 0] -> lane x
    sinit = jnp.zeros((feat, feat), f32).at[jnp.arange(dim_x) * dim_t, jnp.arange(dim_x)].set(1.0)
    add('sinit', sinit, read_rows=feat)

    # aux2_map over the lane-stacked recorded states as ONE matmul:
    #   M_big[t*dim_y + y, x*dim_t + u] = Wm[y, x] * (u == t)
    wm, bm = p['aux2_map']
    mbig = jnp.einsum('yx,tu->tyxu', wm, jnp.eye(dim_t, dtype=f32)).reshape(dim_t * dim_y,
                                                                            dim_x * dim_t)
    add('mbig', mbig, read_rows=feat)

    # aux2_res MLP; output bias pre-summed with the repeated aux2_map bias
    (wq1, bq1), (wq2, bq2) = p['aux2_res']
    wq1_s = jnp.zeros((EPS_W, feat), f32).at[:wq1.shape[0], :wq1.shape[1]].set(wq1)
    add('wq1', wq1_s, read_rows=EPS_W)
    add('bq1', bq1)
    add('wq2', wq2, read_rows=feat)
    add('bq2bm', bq2 + jnp.repeat(bm, dim_t))

    wslab = jnp.concatenate(pieces, axis=0)
    return wslab, offs


# ------------------------------------------------------------------------------------
# Deterministic parameter initialization (shapes follow the module's __init__)
# ------------------------------------------------------------------------------------
def _init_linear(key, din, dout, scale=0.1):
    kw, kb = jax.random.split(key)
    w = (scale * jax.random.normal(kw, (din, dout))).astype(jnp.float32)
    b = (scale * jax.random.normal(kb, (dout,))).astype(jnp.float32)
    return (w, b)


def _init_mlp(key, dims, scale=0.1):
    keys = jax.random.split(key, len(dims) - 1)
    return [_init_linear(k, dims[i], dims[i + 1], scale) for i, k in enumerate(keys)]


def init_params(key, cfg):
    dim_x = cfg['dim_x']; dim_y = dim_x; dim_t = cfg['dim_t']
    dza1 = cfg['dim_z_aux1']; dza2 = cfg['dim_z_aux2']
    nuf = cfg['num_units_feat']
    ks = jax.random.split(key, 14)
    p = {}
    # Encoders
    p['feat_aux1'] = _init_mlp(ks[0], [dim_x * dim_t] + cfg['hidlayers_feat'] + [nuf])
    p['z_aux1_mean'] = _init_mlp(ks[1], [nuf] + cfg['hidlayers_aux1_enc'] + [dza1])
    p['z_aux1_lnvar'] = _init_mlp(ks[2], [nuf] + cfg['hidlayers_aux1_enc'] + [dza1])
    p['feat_aux2'] = _init_mlp(ks[3], [dim_x * dim_t] + cfg['hidlayers_feat'] + [nuf])
    p['z_aux2_mean'] = _init_mlp(ks[4], [nuf] + cfg['hidlayers_aux2_enc'] + [dza2])
    p['z_aux2_lnvar'] = _init_mlp(ks[5], [nuf] + cfg['hidlayers_aux2_enc'] + [dza2])
    p['unmixer_map'] = _init_linear(ks[6], dim_x, dim_y)
    p['unmixer_res'] = _init_mlp(ks[7], [dza1 + dza2] + cfg['hidlayers_unmixer'] + [dim_y * dim_t])
    p['feat_phy'] = _init_mlp(ks[8], [dim_y * dim_t] + cfg['hidlayers_feat'] + [nuf])
    p['dcoeff_mean'] = _init_mlp(ks[9], [nuf] + cfg['hidlayers_dcoeff'] + [1])
    p['dcoeff_lnvar'] = _init_mlp(ks[10], [nuf] + cfg['hidlayers_dcoeff'] + [1])
    # Decoders
    p['aux1_dec'] = _init_mlp(ks[11], [dza1 + dim_y + 2] + cfg['hidlayers_aux1_dec'] + [dim_y])
    p['aux2_map'] = _init_linear(ks[12], dim_y, dim_x)
    p['aux2_res'] = _init_mlp(ks[13], [1 + dza1 + dza2] + cfg['hidlayers_aux2_dec'] + [dim_x * dim_t])
    return p


if __name__ == "__main__":
    key = jax.random.PRNGKey(0)
    kp, kx = jax.random.split(key)
    cfg = CONFIG
    params = init_params(kp, cfg)
    wslab, offs = pack_params(params, cfg)          # one-time weight packing into one slab

    n = 2
    x = jax.random.normal(kx, (n, cfg['dim_x'], cfg['dim_t']), jnp.float32)
    eps = make_eps(n, cfg['dim_z_aux1'], cfg['dim_z_aux2'], hard_z=True)   # hard_z=True path

    fwd = jax.jit(lambda slab, xx, ee: vae_forward(slab, xx, ee, offs, cfg, reconstruct=True))
    dcoeff_stat, z1_stat, z2_stat, x_mean, x_lnvar = fwd(wslab, x, eps)

    jax.block_until_ready(x_mean)
    jax.block_until_ready(x_lnvar)
    jax.block_until_ready(dcoeff_stat['mean'])
    assert x_mean.shape == (n, cfg['dim_x'], cfg['dim_t'])
    assert dcoeff_stat['mean'].shape == (n, 1)
    assert z1_stat['mean'].shape == (n, cfg['dim_z_aux1'])
    assert z2_stat['mean'].shape == (n, cfg['dim_z_aux2'])
    assert bool(jnp.all(jnp.isfinite(x_mean)))
    print("KERNEL_OK")
</pallas_src>

<mosaic_0001>
module attributes {stable_mosaic.version = 11 : i64} {
  func.func @_vae_kernel(%arg0: i32, %arg1: memref<8x128xf32, #tpu.memory_space<vmem>>, %arg2: memref<8x16xf32, #tpu.memory_space<vmem>>, %arg3: memref<2200x128xf32, #tpu.memory_space<vmem>>, %arg4: memref<8x128xf32, #tpu.memory_space<vmem>>, %arg5: memref<8x128xf32, #tpu.memory_space<vmem>>) attributes {dimension_semantics = [#tpu.dimension_semantics<parallel>], iteration_bounds = array<i64: 1>, scalar_prefetch = 0 : i64, scratch_operands = 0 : i64, tpu.core_type = #tpu.core_type<tc>, window_params = [{transform_indices = @transform_0, window_bounds = array<i64: 8, 128>}, {transform_indices = @transform_1, window_bounds = array<i64: 8, 16>}, {pipeline_mode = #tpu.pipeline_mode<synchronous>, transform_indices = @transform_2, window_bounds = array<i64: 2200, 128>}, {transform_indices = @transform_3, window_bounds = array<i64: 8, 128>}, {transform_indices = @transform_4, window_bounds = array<i64: 8, 128>}]} {
    %c0 = arith.constant 0 : index
    %c0_0 = arith.constant 0 : index
    %0 = vector.load %arg1[%c0, %c0_0] : memref<8x128xf32, #tpu.memory_space<vmem>>, vector<8x128xf32>
    %c0_1 = arith.constant 0 : index
    %c0_2 = arith.constant 0 : index
    %1 = vector.load %arg2[%c0_1, %c0_2] : memref<8x16xf32, #tpu.memory_space<vmem>>, vector<8x16xf32>
    %c0_3 = arith.constant 0 : index
    %c0_4 = arith.constant 0 : index
    %2 = vector.load %arg3[%c0_3, %c0_4] : memref<2200x128xf32, #tpu.memory_space<vmem>>, vector<128x128xf32>
    %cst = arith.constant dense<0.000000e+00> : vector<8x128xf32>
    %3 = tpu.matmul %0, %2, %cst {dimension_numbers = #tpu.dot_dimension_numbers<[1], [0], [0], [1], [0, 0, 1, 1], [], []>} : vector<8x128xf32>, vector<128x128xf32>, vector<8x128xf32> -> vector<8x128xf32>
    %c128 = arith.constant 128 : index
    %c0_5 = arith.constant 0 : index
    %4 = vector.load %arg3[%c128, %c0_5] : memref<2200x128xf32, #tpu.memory_space<vmem>>, vector<1x128xf32>
    %5 = vector.broadcast %4 : vector<1x128xf32> to vector<8x128xf32>
    %6 = arith.addf %3, %5 : vector<8x128xf32>
    %cst_6 = arith.constant 0.000000e+00 : f32
    %7 = vector.broadcast %cst_6 : f32 to vector<8x128xf32>
    %8 = arith.maximumf %6, %7 : vector<8x128xf32>
    %c136 = arith.constant 136 : index
    %c0_7 = arith.constant 0 : index
    %9 = vector.load %arg3[%c136, %c0_7] : memref<2200x128xf32, #tpu.memory_space<vmem>>, vector<128x128xf32>
    %cst_8 = arith.constant dense<0.000000e+00> : vector<8x128xf32>
    %10 = tpu.matmul %8, %9, %cst_8 {dimension_numbers = #tpu.dot_dimension_numbers<[1], [0], [0], [1], [0, 0, 1, 1], [], []>} : vector<8x128xf32>, vector<128x128xf32>, vector<8x128xf32> -> vector<8x128xf32>
    %c264 = arith.constant 264 : index
    %c0_9 = arith.constant 0 : index
    %11 = vector.load %arg3[%c264, %c0_9] : memref<2200x128xf32, #tpu.memory_space<vmem>>, vector<1x128xf32>
    %12 = vector.broadcast %11 : vector<1x128xf32> to vector<8x128xf32>
    %13 = arith.addf %10, %12 : vector<8x128xf32>
    %cst_10 = arith.constant 0.000000e+00 : f32
    %14 = vector.broadcast %cst_10 : f32 to vector<8x128xf32>
    %15 = arith.maximumf %13, %14 : vector<8x128xf32>
    %c272 = arith.constant 272 : index
    %c0_11 = arith.constant 0 : index
    %16 = vector.load %arg3[%c272, %c0_11] : memref<2200x128xf32, #tpu.memory_space<vmem>>, vector<128x128xf32>
    %cst_12 = arith.constant dense<0.000000e+00> : vector<8x128xf32>
    %17 = tpu.matmul %15, %16, %cst_12 {dimension_numbers = #tpu.dot_dimension_numbers<[1], [0], [0], [1], [0, 0, 1, 1], [], []>} : vector<8x128xf32>, vector<128x128xf32>, vector<8x128xf32> -> vector<8x128xf32>
    %c400 = arith.constant 400 : index
    %c0_13 = arith.constant 0 : index
    %18 = vector.load %arg3[%c400, %c0_13] : memref<2200x128xf32, #tpu.memory_space<vmem>>, vector<1x128xf32>
    %19 = vector.broadcast %18 : vector<1x128xf32> to vector<8x128xf32>
    %20 = arith.addf %17, %19 : vector<8x128xf32>
    %cst_14 = arith.constant 0.000000e+00 : f32
    %21 = vector.broadcast %cst_14 : f32 to vector<8x128xf32>
    %22 = arith.maximumf %20, %21 : vector<8x128xf32>
    %c408 = arith.constant 408 : index
    %c0_15 = arith.constant 0 : index
    %23 = vector.load %arg3[%c408, %c0_15] : memref<2200x128xf32, #tpu.memory_space<vmem>>, vector<128x128xf32>
    %cst_16 = arith.constant dense<0.000000e+00> : vector<8x128xf32>
    %24 = tpu.matmul %22, %23, %cst_16 {dimension_numbers = #tpu.dot_dimension_numbers<[1], [0], [0], [1], [0, 0, 1, 1], [], []>} : vector<8x128xf32>, vector<128x128xf32>, vector<8x128xf32> -> vector<8x128xf32>
    %c536 = arith.constant 536 : index
    %c0_17 = arith.constant 0 : index
    %25 = vector.load %arg3[%c536, %c0_17] : memref<2200x128xf32, #tpu.memory_space<vmem>>, vector<1x128xf32>
    %26 = vector.broadcast %25 : vector<1x128xf32> to vector<8x128xf32>
    %27 = arith.addf %24, %26 : vector<8x128xf32>
    %c672 = arith.constant 672 : index
    %c0_18 = arith.constant 0 : index
    %28 = vector.load %arg3[%c672, %c0_18] : memref<2200x128xf32, #tpu.memory_space<vmem>>, vector<128x128xf32>
    %cst_19 = arith.constant dense<0.000000e+00> : vector<8x128xf32>
    %29 = tpu.matmul %27, %28, %cst_19 {dimension_numbers = #tpu.dot_dimension_numbers<[1], [0], [0], [1], [0, 0, 1, 1], [], []>} : vector<8x128xf32>, vector<128x128xf32>, vector<8x128xf32> -> vector<8x128xf32>
    %c800 = arith.constant 800 : index
    %c0_20 = arith.constant 0 : index
    %30 = vector.load %arg3[%c800, %c0_20] : memref<2200x128xf32, #tpu.memory_space<vmem>>, vector<1x128xf32>
    %31 = vector.broadcast %30 : vector<1x128xf32> to vector<8x128xf32>
    %32 = arith.addf %29, %31 : vector<8x128xf32>
    %cst_21 = arith.constant 0.000000e+00 : f32
    %33 = vector.broadcast %cst_21 : f32 to vector<8x128xf32>
    %34 = arith.maximumf %32, %33 : vector<8x128xf32>
    %c544 = arith.constant 544 : index
    %c0_22 = arith.constant 0 : index
    %35 = vector.load %arg3[%c544, %c0_22] : memref<2200x128xf32, #tpu.memory_space<vmem>>, vector<128x128xf32>
    %cst_23 = arith.constant dense<0.000000e+00> : vector<8x128xf32>
    %36 = tpu.matmul %0, %35, %cst_23 {dimension_numbers = #tpu.dot_dimension_numbers<[1], [0], [0], [1], [0, 0, 1, 1], [], []>} : vector<8x128xf32>, vector<128x128xf32>, vector<8x128xf32> -> vector<8x128xf32>
    %c808 = arith.constant 808 : index
    %c0_24 = arith.constant 0 : index
    %37 = vector.load %arg3[%c808, %c0_24] : memref<2200x128xf32, #tpu.memory_space<vmem>>, vector<128x128xf32>
    %cst_25 = arith.constant dense<0.000000e+00> : vector<8x128xf32>
    %38 = tpu.matmul %34, %37, %cst_25 {dimension_numbers = #tpu.dot_dimension_numbers<[1], [0], [0], [1], [0, 0, 1, 1], [], []>} : vector<8x128xf32>, vector<128x128xf32>, vector<8x128xf32> -> vector<8x128xf32>
    %39 = arith.addf %36, %38 : vector<8x128xf32>
    %c936 = arith.constant 936 : index
    %c0_26 = arith.constant 0 : index
    %40 = vector.load %arg3[%c936, %c0_26] : memref<2200x128xf32, #tpu.memory_space<vmem>>, vector<1x128xf32>
    %41 = vector.broadcast %40 : vector<1x128xf32> to vector<8x128xf32>
    %42 = arith.addf %39, %41 : vector<8x128xf32>
    %c944 = arith.constant 944 : index
    %c0_27 = arith.constant 0 : index
    %43 = vector.load %arg3[%c944, %c0_27] : memref<2200x128xf32, #tpu.memory_space<vmem>>, vector<128x128xf32>
    %cst_28 = arith.constant dense<0.000000e+00> : vector<8x128xf32>
    %44 = tpu.matmul %42, %43, %cst_28 {dimension_numbers = #tpu.dot_dimension_numbers<[1], [0], [0], [1], [0, 0, 1, 1], [], []>} : vector<8x128xf32>, vector<128x128xf32>, vector<8x128xf32> -> vector<8x128xf32>
    %c1072 = arith.constant 1072 : index
    %c0_29 = arith.constant 0 : index
    %45 = vector.load %arg3[%c1072, %c0_29] : memref<2200x128xf32, #tpu.memory_space<vmem>>, vector<1x128xf32>
    %46 = vector.broadcast %45 : vector<1x128xf32> to vector<8x128xf32>
    %47 = arith.addf %44, %46 : vector<8x128xf32>
    %cst_30 = arith.constant 0.000000e+00 : f32
    %48 = vector.broadcast %cst_30 : f32 to vector<8x128xf32>
    %49 = arith.maximumf %47, %48 : vector<8x128xf32>
    %c1080 = arith.constant 1080 : index
    %c0_31 = arith.constant 0 : index
    %50 = vector.load %arg3[%c1080, %c0_31] : memref<2200x128xf32, #tpu.memory_space<vmem>>, vector<128x128xf32>
    %cst_32 = arith.constant dense<0.000000e+00> : vector<8x128xf32>
    %51 = tpu.matmul %49, %50, %cst_32 {dimension_numbers = #tpu.dot_dimension_numbers<[1], [0], [0], [1], [0, 0, 1, 1], [], []>} : vector<8x128xf32>, vector<128x128xf32>, vector<8x128xf32> -> vector<8x128xf32>
    %c1208 = arith.constant 1208 : index
    %c0_33 = arith.constant 0 : index
    %52 = vector.load %arg3[%c1208, %c0_33] : memref<2200x128xf32, #tpu.memory_space<vmem>>, vector<1x128xf32>
    %53 = vector.broadcast %52 : vector<1x128xf32> to vector<8x128xf32>
    %54 = arith.addf %51, %53 : vector<8x128xf32>
    %cst_34 = arith.constant 0.000000e+00 : f32
    %55 = vector.broadcast %cst_34 : f32 to vector<8x128xf32>
    %56 = arith.maximumf %54, %55 : vector<8x128xf32>
    %c1216 = arith.constant 1216 : index
    %c0_35 = arith.constant 0 : index
    %57 = vector.load %arg3[%c1216, %c0_35] : memref<2200x128xf32, #tpu.memory_space<vmem>>, vector<128x128xf32>
    %cst_36 = arith.constant dense<0.000000e+00> : vector<8x128xf32>
    %58 = tpu.matmul %56, %57, %cst_36 {dimension_numbers = #tpu.dot_dimension_numbers<[1], [0], [0], [1], [0, 0, 1, 1], [], []>} : vector<8x128xf32>, vector<128x128xf32>, vector<8x128xf32> -> vector<8x128xf32>
    %c1344 = arith.constant 1344 : index
    %c0_37 = arith.constant 0 : index
    %59 = vector.load %arg3[%c1344, %c0_37] : memref<2200x128xf32, #tpu.memory_space<vmem>>, vector<1x128xf32>
    %60 = vector.broadcast %59 : vector<1x128xf32> to vector<8x128xf32>
    %61 = arith.addf %58, %60 : vector<8x128xf32>
    %cst_38 = arith.constant 0.000000e+00 : f32
    %62 = vector.broadcast %cst_38 : f32 to vector<8x128xf32>
    %63 = arith.maximumf %61, %62 : vector<8x128xf32>
    %c1352 = arith.constant 1352 : index
    %c0_39 = arith.constant 0 : index
    %64 = vector.load %arg3[%c1352, %c0_39] : memref<2200x128xf32, #tpu.memory_space<vmem>>, vector<128x128xf32>
    %cst_40 = arith.constant dense<0.000000e+00> : vector<8x128xf32>
    %65 = tpu.matmul %63, %64, %cst_40 {dimension_numbers = #tpu.dot_dimension_numbers<[1], [0], [0], [1], [0, 0, 1, 1], [], []>} : vector<8x128xf32>, vector<128x128xf32>, vector<8x128xf32> -> vector<8x128xf32>
    %c1480 = arith.constant 1480 : index
    %c0_41 = arith.constant 0 : index
    %66 = vector.load %arg3[%c1480, %c0_41] : memref<2200x128xf32, #tpu.memory_space<vmem>>, vector<1x128xf32>
    %67 = vector.broadcast %66 : vector<1x128xf32> to vector<8x128xf32>
    %68 = arith.addf %65, %67 : vector<8x128xf32>
    %69 = tpu.iota {dimensions = array<i32: 1>} : vector<8x128xi32>
    %c16_i32 = arith.constant 16 : i32
    %70 = vector.broadcast %c16_i32 : i32 to vector<8x128xi32>
    %71 = arith.cmpi eq, %69, %70 : vector<8x128xi32>
    %cst_42 = arith.constant 0.000000e+00 : f32
    %72 = vector.broadcast %cst_42 : f32 to vector<8x128xf32>
    %73 = arith.maximumf %68, %72 : vector<8x128xf32>
    %74 = vector.broadcast %cst_42 : f32 to vector<8x128xf32>
    %75 = arith.subf %68, %74 : vector<8x128xf32>
    %76 = arith.cmpf one, %75, %75 : vector<8x128xf32>
    %77 = vector.broadcast %cst_42 : f32 to vector<8x128xf32>
    %78 = arith.addf %68, %77 : vector<8x128xf32>
    %79 = math.absf %75 : vector<8x128xf32>
    %cst_43 = arith.constant 0.000000e+00 : f32
    %80 = vector.broadcast %cst_43 : f32 to vector<8x128xf32>
    %81 = arith.subf %80, %79 : vector<8x128xf32>
    %82 = math.exp %81 : vector<8x128xf32>
    %83 = math.log1p %82 : vector<8x128xf32>
    %84 = arith.addf %73, %83 : vector<8x128xf32>
    %85 = arith.select %76, %78, %84 : vector<8x128xi1>, vector<8x128xf32>
    %86 = arith.select %71, %85, %68 : vector<8x128xi1>, vector<8x128xf32>
    %87 = arith.addf %27, %86 : vector<8x128xf32>
    %c0_44 = arith.constant 0 : index
    %c0_45 = arith.constant 0 : index
    %88 = vector.load %arg5[%c0_44, %c0_45] : memref<8x128xf32, #tpu.memory_space<vmem>>, vector<8x128xf32>
    tpu.vector_store %arg5[%c0_44, %c0_45], %87 {strides = array<i32>} : memref<8x128xf32, #tpu.memory_space<vmem>>, vector<8x128xf32>,
    %89 = vector.extract_strided_slice %86 {offsets = [0, 16], sizes = [8, 1], strides = [1, 1]} : vector<8x128xf32> to vector<8x1xf32>
    %90 = vector.extract_strided_slice %86 {offsets = [0, 17], sizes = [8, 1], strides = [1, 1]} : vector<8x128xf32> to vector<8x1xf32>
    %91 = vector.extract_strided_slice %27 {offsets = [0, 0], sizes = [8, 4], strides = [1, 1]} : vector<8x128xf32> to vector<8x4xf32>
    %92 = vector.extract_strided_slice %27 {offsets = [0, 4], sizes = [8, 4], strides = [1, 1]} : vector<8x128xf32> to vector<8x4xf32>
    %93 = vector.extract_strided_slice %27 {offsets = [0, 8], sizes = [8, 4], strides = [1, 1]} : vector<8x128xf32> to vector<8x4xf32>
    %94 = vector.extract_strided_slice %27 {offsets = [0, 12], sizes = [8, 4], strides = [1, 1]} : vector<8x128xf32> to vector<8x4xf32>
    %cst_46 = arith.constant 5.000000e-01 : f32
    %95 = vector.broadcast %cst_46 : f32 to vector<8x1xf32>
    %96 = arith.mulf %95, %90 : vector<8x1xf32>
    %97 = math.exp %96 : vector<8x1xf32>
    %98 = vector.extract_strided_slice %1 {offsets = [0, 0], sizes = [8, 1], strides = [1, 1]} : vector<8x16xf32> to vector<8x1xf32>
    %99 = arith.mulf %97, %98 : vector<8x1xf32>
    %100 = arith.addf %89, %99 : vector<8x1xf32>
    %cst_47 = arith.constant 5.000000e-03 : f32
    %cst_48 = arith.constant 2.000000e-01 : f32
    %101 = vector.broadcast %cst_47 : f32 to vector<8x1xf32>
    %102 = arith.maximumf %101, %100 : vector<8x1xf32>
    %103 = vector.broadcast %cst_48 : f32 to vector<8x1xf32>
    %104 = arith.minimumf %103, %102 : vector<8x1xf32>
    %cst_49 = arith.constant 5.000000e-01 : f32
    %105 = vector.broadcast %cst_49 : f32 to vector<8x4xf32>
    %106 = arith.mulf %105, %92 : vector<8x4xf32>
    %107 = math.exp %106 : vector<8x4xf32>
    %108 = vector.extract_strided_slice %1 {offsets = [0, 1], sizes = [8, 4], strides = [1, 1]} : vector<8x16xf32> to vector<8x4xf32>
    %109 = arith.mulf %107, %108 : vector<8x4xf32>
    %110 = arith.addf %91, %109 : vector<8x4xf32>
    %cst_50 = arith.constant 5.000000e-01 : f32
    %111 = vector.broadcast %cst_50 : f32 to vector<8x4xf32>
    %112 = arith.mulf %111, %94 : vector<8x4xf32>
    %113 = math.exp %112 : vector<8x4xf32>
    %114 = vector.extract_strided_slice %1 {offsets = [0, 5], sizes = [8, 4], strides = [1, 1]} : vector<8x16xf32> to vector<8x4xf32>
    %115 = arith.mulf %113, %114 : vector<8x4xf32>
    %116 = arith.addf %93, %115 : vector<8x4xf32>
    %cst_51 = arith.constant 0.000000e+00 : f32
    %117 = vector.broadcast %cst_51 : f32 to vector<8x7xf32>
    %118 = tpu.concatenate %104, %110, %116, %117 in 1 : vector<8x1xf32>, vector<8x4xf32>, vector<8x4xf32>, vector<8x7xf32> -> vector<8x16xf32>
    %c1616 = arith.constant 1616 : index
    %c0_52 = arith.constant 0 : index
    %119 = vector.load %arg3[%c1616, %c0_52] : memref<2200x128xf32, #tpu.memory_space<vmem>>, vector<16x128xf32>
    %cst_53 = arith.constant dense<0.000000e+00> : vector<8x128xf32>
    %120 = tpu.matmul %118, %119, %cst_53 {dimension_numbers = #tpu.dot_dimension_numbers<[1], [0], [0], [1], [0, 0, 1, 1], [], []>} : vector<8x16xf32>, vector<16x128xf32>, vector<8x128xf32> -> vector<8x128xf32>
    %c2040 = arith.constant 2040 : index
    %c0_54 = arith.constant 0 : index
    %121 = vector.load %arg3[%c2040, %c0_54] : memref<2200x128xf32, #tpu.memory_space<vmem>>, vector<16x128xf32>
    %cst_55 = arith.constant dense<0.000000e+00> : vector<8x128xf32>
    %122 = tpu.matmul %118, %121, %cst_55 {dimension_numbers = #tpu.dot_dimension_numbers<[1], [0], [0], [1], [0, 0, 1, 1], [], []>} : vector<8x16xf32>, vector<16x128xf32>, vector<8x128xf32> -> vector<8x128xf32>
    %c2056 = arith.constant 2056 : index
    %c0_56 = arith.constant 0 : index
    %123 = vector.load %arg3[%c2056, %c0_56] : memref<2200x128xf32, #tpu.memory_space<vmem>>, vector<1x128xf32>
    %124 = vector.broadcast %123 : vector<1x128xf32> to vector<8x128xf32>
    %125 = arith.addf %122, %124 : vector<8x128xf32>
    %cst_57 = arith.constant 0.000000e+00 : f32
    %126 = vector.broadcast %cst_57 : f32 to vector<8x128xf32>
    %127 = arith.maximumf %125, %126 : vector<8x128xf32>
    %c2064 = arith.constant 2064 : index
    %c0_58 = arith.constant 0 : index
    %128 = vector.load %arg3[%c2064, %c0_58] : memref<2200x128xf32, #tpu.memory_space<vmem>>, vector<128x128xf32>
    %cst_59 = arith.constant dense<0.000000e+00> : vector<8x128xf32>
    %129 = tpu.matmul %127, %128, %cst_59 {dimension_numbers = #tpu.dot_dimension_numbers<[1], [0], [0], [1], [0, 0, 1, 1], [], []>} : vector<8x128xf32>, vector<128x128xf32>, vector<8x128xf32> -> vector<8x128xf32>
    %c2192 = arith.constant 2192 : index
    %c0_60 = arith.constant 0 : index
    %130 = vector.load %arg3[%c2192, %c0_60] : memref<2200x128xf32, #tpu.memory_space<vmem>>, vector<1x128xf32>
    %131 = vector.broadcast %130 : vector<1x128xf32> to vector<8x128xf32>
    %132 = arith.addf %129, %131 : vector<8x128xf32>
    %cst_61 = arith.constant 2.500000e+00 : f32
    %133 = vector.broadcast %cst_61 : f32 to vector<8x1xf32>
    %134 = arith.mulf %104, %133 : vector<8x1xf32>
    %c1784 = arith.constant 1784 : index
    %c0_62 = arith.constant 0 : index
    %135 = vector.load %arg3[%c1784, %c0_62] : memref<2200x128xf32, #tpu.memory_space<vmem>>, vector<128x128xf32>
    %cst_63 = arith.constant dense<0.000000e+00> : vector<8x128xf32>
    %136 = tpu.matmul %0, %135, %cst_63 {dimension_numbers = #tpu.dot_dimension_numbers<[1], [0], [0], [1], [0, 0, 1, 1], [], []>} : vector<8x128xf32>, vector<128x128xf32>, vector<8x128xf32> -> vector<8x128xf32>
    %c1488 = arith.constant 1488 : index
    %c0_64 = arith.constant 0 : index
    %137 = vector.load %arg3[%c1488, %c0_64] : memref<2200x128xf32, #tpu.memory_space<vmem>>, vector<128x128xf32>
    %c1648 = arith.constant 1648 : index
    %c0_65 = arith.constant 0 : index
    %138 = vector.load %arg3[%c1648, %c0_65] : memref<2200x128xf32, #tpu.memory_space<vmem>>, vector<128x128xf32>
    %c1776 = arith.constant 1776 : index
    %c0_66 = arith.constant 0 : index
    %139 = vector.load %arg3[%c1776, %c0_66] : memref<2200x128xf32, #tpu.memory_space<vmem>>, vector<1x128xf32>
    %140 = tpu.iota {dimensions = array<i32: 1>} : vector<8x128xi32>
    %c16_i32_67 = arith.constant 16 : i32
    %141 = vector.broadcast %c16_i32_67 : i32 to vector<8x128xi32>
    %142 = arith.cmpi slt, %140, %141 : vector<8x128xi32>
    %143 = vector.extract_strided_slice %136 {offsets = [0, 0], sizes = [8, 16], strides = [1, 1]} : vector<8x128xf32> to vector<8x16xf32>
    %c1632 = arith.constant 1632 : index
    %c0_68 = arith.constant 0 : index
    %144 = vector.load %arg3[%c1632, %c0_68] : memref<2200x128xf32, #tpu.memory_space<vmem>>, vector<1x128xf32>
    %cst_69 = arith.constant dense<0.000000e+00> : vector<8x128xf32>
    %145 = tpu.matmul %136, %137, %cst_69 {dimension_numbers = #tpu.dot_dimension_numbers<[1], [0], [0], [1], [0, 0, 1, 1], [], []>} : vector<8x128xf32>, vector<128x128xf32>, vector<8x128xf32> -> vector<8x128xf32>
    %146 = arith.addf %145, %120 : vector<8x128xf32>
    %147 = vector.broadcast %144 : vector<1x128xf32> to vector<8x128xf32>
    %148 = arith.addf %146, %147 : vector<8x128xf32>
    %cst_70 = arith.constant 0.000000e+00 : f32
    %149 = vector.broadcast %cst_70 : f32 to vector<8x128xf32>
    %150 = arith.select %142, %148, %149 : vector<8x128xi1>, vector<8x128xf32>
    %151 = vector.broadcast %134 : vector<8x1xf32> to vector<8x128xf32>
    %152 = arith.mulf %151, %150 : vector<8x128xf32>
    %153 = arith.addf %136, %152 : vector<8x128xf32>
    %cst_71 = arith.constant 0.000000e+00 : f32
    %154 = vector.broadcast %cst_71 : f32 to vector<8x128xf32>
    %155 = arith.maximumf %148, %154 : vector<8x128xf32>
    %cst_72 = arith.constant dense<0.000000e+00> : vector<8x128xf32>
    %156 = tpu.matmul %155, %138, %cst_72 {dimension_numbers = #tpu.dot_dimension_numbers<[1], [0], [0], [1], [0, 0, 1, 1], [], []>} : vector<8x128xf32>, vector<128x128xf32>, vector<8x128xf32> -> vector<8x128xf32>
    %157 = arith.addf %153, %156 : vector<8x128xf32>
    %158 = vector.broadcast %139 : vector<1x128xf32> to vector<8x128xf32>
    %159 = arith.addf %157, %158 : vector<8x128xf32>
    %c1633 = arith.constant 1633 : index
    %c0_73 = arith.constant 0 : index
    %160 = vector.load %arg3[%c1633, %c0_73] : memref<2200x128xf32, #tpu.memory_space<vmem>>, vector<1x128xf32>
    %cst_74 = arith.constant dense<0.000000e+00> : vector<8x128xf32>
    %161 = tpu.matmul %159, %137, %cst_74 {dimension_numbers = #tpu.dot_dimension_numbers<[1], [0], [0], [1], [0, 0, 1, 1], [], []>} : vector<8x128xf32>, vector<128x128xf32>, vector<8x128xf32> -> vector<8x128xf32>
    %162 = arith.addf %161, %120 : vector<8x128xf32>
    %163 = vector.broadcast %160 : vector<1x128xf32> to vector<8x128xf32>
    %164 = arith.addf %162, %163 : vector<8x128xf32>
    %cst_75 = arith.constant 0.000000e+00 : f32
    %165 = vector.broadcast %cst_75 : f32 to vector<8x128xf32>
    %166 = arith.select %142, %164, %165 : vector<8x128xi1>, vector<8x128xf32>
    %167 = vector.broadcast %134 : vector<8x1xf32> to vector<8x128xf32>
    %168 = arith.mulf %167, %166 : vector<8x128xf32>
    %169 = arith.addf %159, %168 : vector<8x128xf32>
    %cst_76 = arith.constant 0.000000e+00 : f32
    %170 = vector.broadcast %cst_76 : f32 to vector<8x128xf32>
    %171 = arith.maximumf %164, %170 : vector<8x128xf32>
    %cst_77 = arith.constant dense<0.000000e+00> : vector<8x128xf32>
    %172 = tpu.matmul %171, %138, %cst_77 {dimension_numbers = #tpu.dot_dimension_numbers<[1], [0], [0], [1], [0, 0, 1, 1], [], []>} : vector<8x128xf32>, vector<128x128xf32>, vector<8x128xf32> -> vector<8x128xf32>
    %173 = arith.addf %169, %172 : vector<8x128xf32>
    %174 = vector.broadcast %139 : vector<1x128xf32> to vector<8x128xf32>
    %175 = arith.addf %173, %174 : vector<8x128xf32>
    %176 = vector.extract_strided_slice %175 {offsets = [0, 0], sizes = [8, 16], strides = [1, 1]} : vector<8x128xf32> to vector<8x16xf32>
    %c1634 = arith.constant 1634 : index
    %c0_78 = arith.constant 0 : index
    %177 = vector.load %arg3[%c1634, %c0_78] : memref<2200x128xf32, #tpu.memory_space<vmem>>, vector<1x128xf32>
    %cst_79 = arith.constant dense<0.000000e+00> : vector<8x128xf32>
    %178 = tpu.matmul %175, %137, %cst_79 {dimension_numbers = #tpu.dot_dimension_numbers<[1], [0], [0], [1], [0, 0, 1, 1], [], []>} : vector<8x128xf32>, vector<128x128xf32>, vector<8x128xf32> -> vector<8x128xf32>
    %179 = arith.addf %178, %120 : vector<8x128xf32>
    %180 = vector.broadcast %177 : vector<1x128xf32> to vector<8x128xf32>
    %181 = arith.addf %179, %180 : vector<8x128xf32>
    %cst_80 = arith.constant 0.000000e+00 : f32
    %182 = vector.broadcast %cst_80 : f32 to vector<8x128xf32>
    %183 = arith.select %142, %181, %182 : vector<8x128xi1>, vector<8x128xf32>
    %184 = vector.broadcast %134 : vector<8x1xf32> to vector<8x128xf32>
    %185 = arith.mulf %184, %183 : vector<8x128xf32>
    %186 = arith.addf %175, %185 : vector<8x128xf32>
    %cst_81 = arith.constant 0.000000e+00 : f32
    %187 = vector.broadcast %cst_81 : f32 to vector<8x128xf32>
    %188 = arith.maximumf %181, %187 : vector<8x128xf32>
    %cst_82 = arith.constant dense<0.000000e+00> : vector<8x128xf32>
    %189 = tpu.matmul %188, %138, %cst_82 {dimension_numbers = #tpu.dot_dimension_numbers<[1], [0], [0], [1], [0, 0, 1, 1], [], []>} : vector<8x128xf32>, vector<128x128xf32>, vector<8x128xf32> -> vector<8x128xf32>
    %190 = arith.addf %186, %189 : vector<8x128xf32>
    %191 = vector.broadcast %139 : vector<1x128xf32> to vector<8x128xf32>
    %192 = arith.addf %190, %191 : vector<8x128xf32>
    %c1635 = arith.constant 1635 : index
    %c0_83 = arith.constant 0 : index
    %193 = vector.load %arg3[%c1635, %c0_83] : memref<2200x128xf32, #tpu.memory_space<vmem>>, vector<1x128xf32>
    %cst_84 = arith.constant dense<0.000000e+00> : vector<8x128xf32>
    %194 = tpu.matmul %192, %137, %cst_84 {dimension_numbers = #tpu.dot_dimension_numbers<[1], [0], [0], [1], [0, 0, 1, 1], [], []>} : vector<8x128xf32>, vector<128x128xf32>, vector<8x128xf32> -> vector<8x128xf32>
    %195 = arith.addf %194, %120 : vector<8x128xf32>
    %196 = vector.broadcast %193 : vector<1x128xf32> to vector<8x128xf32>
    %197 = arith.addf %195, %196 : vector<8x128xf32>
    %cst_85 = arith.constant 0.000000e+00 : f32
    %198 = vector.broadcast %cst_85 : f32 to vector<8x128xf32>
    %199 = arith.select %142, %197, %198 : vector<8x128xi1>, vector<8x128xf32>
    %200 = vector.broadcast %134 : vector<8x1xf32> to vector<8x128xf32>
    %201 = arith.mulf %200, %199 : vector<8x128xf32>
    %202 = arith.addf %192, %201 : vector<8x128xf32>
    %cst_86 = arith.constant 0.000000e+00 : f32
    %203 = vector.broadcast %cst_86 : f32 to vector<8x128xf32>
    %204 = arith.maximumf %197, %203 : vector<8x128xf32>
    %cst_87 = arith.constant dense<0.000000e+00> : vector<8x128xf32>
    %205 = tpu.matmul %204, %138, %cst_87 {dimension_numbers = #tpu.dot_dimension_numbers<[1], [0], [0], [1], [0, 0, 1, 1], [], []>} : vector<8x128xf32>, vector<128x128xf32>, vector<8x128xf32> -> vector<8x128xf32>
    %206 = arith.addf %202, %205 : vector<8x128xf32>
    %207 = vector.broadcast %139 : vector<1x128xf32> to vector<8x128xf32>
    %208 = arith.addf %206, %207 : vector<8x128xf32>
    %209 = vector.extract_strided_slice %208 {offsets = [0, 0], sizes = [8, 16], strides = [1, 1]} : vector<8x128xf32> to vector<8x16xf32>
    %c1636 = arith.constant 1636 : index
    %c0_88 = arith.constant 0 : index
    %210 = vector.load %arg3[%c1636, %c0_88] : memref<2200x128xf32, #tpu.memory_space<vmem>>, vector<1x128xf32>
    %cst_89 = arith.constant dense<0.000000e+00> : vector<8x128xf32>
    %211 = tpu.matmul %208, %137, %cst_89 {dimension_numbers = #tpu.dot_dimension_numbers<[1], [0], [0], [1], [0, 0, 1, 1], [], []>} : vector<8x128xf32>, vector<128x128xf32>, vector<8x128xf32> -> vector<8x128xf32>
    %212 = arith.addf %211, %120 : vector<8x128xf32>
    %213 = vector.broadcast %210 : vector<1x128xf32> to vector<8x128xf32>
    %214 = arith.addf %212, %213 : vector<8x128xf32>
    %cst_90 = arith.constant 0.000000e+00 : f32
    %215 = vector.broadcast %cst_90 : f32 to vector<8x128xf32>
    %216 = arith.select %142, %214, %215 : vector<8x128xi1>, vector<8x128xf32>
    %217 = vector.broadcast %134 : vector<8x1xf32> to vector<8x128xf32>
    %218 = arith.mulf %217, %216 : vector<8x128xf32>
    %219 = arith.addf %208, %218 : vector<8x128xf32>
    %cst_91 = arith.constant 0.000000e+00 : f32
    %220 = vector.broadcast %cst_91 : f32 to vector<8x128xf32>
    %221 = arith.maximumf %214, %220 : vector<8x128xf32>
    %cst_92 = arith.constant dense<0.000000e+00> : vector<8x128xf32>
    %222 = tpu.matmul %221, %138, %cst_92 {dimension_numbers = #tpu.dot_dimension_numbers<[1], [0], [0], [1], [0, 0, 1, 1], [], []>} : vector<8x128xf32>, vector<128x128xf32>, vector<8x128xf32> -> vector<8x128xf32>
    %223 = arith.addf %219, %222 : vector<8x128xf32>
    %224 = vector.broadcast %139 : vector<1x128xf32> to vector<8x128xf32>
    %225 = arith.addf %223, %224 : vector<8x128xf32>
    %c1637 = arith.constant 1637 : index
    %c0_93 = arith.constant 0 : index
    %226 = vector.load %arg3[%c1637, %c0_93] : memref<2200x128xf32, #tpu.memory_space<vmem>>, vector<1x128xf32>
    %cst_94 = arith.constant dense<0.000000e+00> : vector<8x128xf32>
    %227 = tpu.matmul %225, %137, %cst_94 {dimension_numbers = #tpu.dot_dimension_numbers<[1], [0], [0], [1], [0, 0, 1, 1], [], []>} : vector<8x128xf32>, vector<128x128xf32>, vector<8x128xf32> -> vector<8x128xf32>
    %228 = arith.addf %227, %120 : vector<8x128xf32>
    %229 = vector.broadcast %226 : vector<1x128xf32> to vector<8x128xf32>
    %230 = arith.addf %228, %229 : vector<8x128xf32>
    %cst_95 = arith.constant 0.000000e+00 : f32
    %231 = vector.broadcast %cst_95 : f32 to vector<8x128xf32>
    %232 = arith.select %142, %230, %231 : vector<8x128xi1>, vector<8x128xf32>
    %233 = vector.broadcast %134 : vector<8x1xf32> to vector<8x128xf32>
    %234 = arith.mulf %233, %232 : vector<8x128xf32>
    %235 = arith.addf %225, %234 : vector<8x128xf32>
    %cst_96 = arith.constant 0.000000e+00 : f32
    %236 = vector.broadcast %cst_96 : f32 to vector<8x128xf32>
    %237 = arith.maximumf %230, %236 : vector<8x128xf32>
    %cst_97 = arith.constant dense<0.000000e+00> : vector<8x128xf32>
    %238 = tpu.matmul %237, %138, %cst_97 {dimension_numbers = #tpu.dot_dimension_numbers<[1], [0], [0], [1], [0, 0, 1, 1], [], []>} : vector<8x128xf32>, vector<128x128xf32>, vector<8x128xf32> -> vector<8x128xf32>
    %239 = arith.addf %235, %238 : vector<8x128xf32>
    %240 = vector.broadcast %139 : vector<1x128xf32> to vector<8x128xf32>
    %241 = arith.addf %239, %240 : vector<8x128xf32>
    %242 = vector.extract_strided_slice %241 {offsets = [0, 0], sizes = [8, 16], strides = [1, 1]} : vector<8x128xf32> to vector<8x16xf32>
    %c1638 = arith.constant 1638 : index
    %c0_98 = arith.constant 0 : index
    %243 = vector.load %arg3[%c1638, %c0_98] : memref<2200x128xf32, #tpu.memory_space<vmem>>, vector<1x128xf32>
    %cst_99 = arith.constant dense<0.000000e+00> : vector<8x128xf32>
    %244 = tpu.matmul %241, %137, %cst_99 {dimension_numbers = #tpu.dot_dimension_numbers<[1], [0], [0], [1], [0, 0, 1, 1], [], []>} : vector<8x128xf32>, vector<128x128xf32>, vector<8x128xf32> -> vector<8x128xf32>
    %245 = arith.addf %244, %120 : vector<8x128xf32>
    %246 = vector.broadcast %243 : vector<1x128xf32> to vector<8x128xf32>
    %247 = arith.addf %245, %246 : vector<8x128xf32>
    %cst_100 = arith.constant 0.000000e+00 : f32
    %248 = vector.broadcast %cst_100 : f32 to vector<8x128xf32>
    %249 = arith.select %142, %247, %248 : vector<8x128xi1>, vector<8x128xf32>
    %250 = vector.broadcast %134 : vector<8x1xf32> to vector<8x128xf32>
    %251 = arith.mulf %250, %249 : vector<8x128xf32>
    %252 = arith.addf %241, %251 : vector<8x128xf32>
    %cst_101 = arith.constant 0.000000e+00 : f32
    %253 = vector.broadcast %cst_101 : f32 to vector<8x128xf32>
    %254 = arith.maximumf %247, %253 : vector<8x128xf32>
    %cst_102 = arith.constant dense<0.000000e+00> : vector<8x128xf32>
    %255 = tpu.matmul %254, %138, %cst_102 {dimension_numbers = #tpu.dot_dimension_numbers<[1], [0], [0], [1], [0, 0, 1, 1], [], []>} : vector<8x128xf32>, vector<128x128xf32>, vector<8x128xf32> -> vector<8x128xf32>
    %256 = arith.addf %252, %255 : vector<8x128xf32>
    %257 = vector.broadcast %139 : vector<1x128xf32> to vector<8x128xf32>
    %258 = arith.addf %256, %257 : vector<8x128xf32>
    %c1639 = arith.constant 1639 : index
    %c0_103 = arith.constant 0 : index
    %259 = vector.load %arg3[%c1639, %c0_103] : memref<2200x128xf32, #tpu.memory_space<vmem>>, vector<1x128xf32>
    %cst_104 = arith.constant dense<0.000000e+00> : vector<8x128xf32>
    %260 = tpu.matmul %258, %137, %cst_104 {dimension_numbers = #tpu.dot_dimension_numbers<[1], [0], [0], [1], [0, 0, 1, 1], [], []>} : vector<8x128xf32>, vector<128x128xf32>, vector<8x128xf32> -> vector<8x128xf32>
    %261 = arith.addf %260, %120 : vector<8x128xf32>
    %262 = vector.broadcast %259 : vector<1x128xf32> to vector<8x128xf32>
    %263 = arith.addf %261, %262 : vector<8x128xf32>
    %cst_105 = arith.constant 0.000000e+00 : f32
    %264 = vector.broadcast %cst_105 : f32 to vector<8x128xf32>
    %265 = arith.select %142, %263, %264 : vector<8x128xi1>, vector<8x128xf32>
    %266 = vector.broadcast %134 : vector<8x1xf32> to vector<8x128xf32>
    %267 = arith.mulf %266, %265 : vector<8x128xf32>
    %268 = arith.addf %258, %267 : vector<8x128xf32>
    %cst_106 = arith.constant 0.000000e+00 : f32
    %269 = vector.broadcast %cst_106 : f32 to vector<8x128xf32>
    %270 = arith.maximumf %263, %269 : vector<8x128xf32>
    %cst_107 = arith.constant dense<0.000000e+00> : vector<8x128xf32>
    %271 = tpu.matmul %270, %138, %cst_107 {dimension_numbers = #tpu.dot_dimension_numbers<[1], [0], [0], [1], [0, 0, 1, 1], [], []>} : vector<8x128xf32>, vector<128x128xf32>, vector<8x128xf32> -> vector<8x128xf32>
    %272 = arith.addf %268, %271 : vector<8x128xf32>
    %273 = vector.broadcast %139 : vector<1x128xf32> to vector<8x128xf32>
    %274 = arith.addf %272, %273 : vector<8x128xf32>
    %275 = vector.extract_strided_slice %274 {offsets = [0, 0], sizes = [8, 16], strides = [1, 1]} : vector<8x128xf32> to vector<8x16xf32>
    %c1640 = arith.constant 1640 : index
    %c0_108 = arith.constant 0 : index
    %276 = vector.load %arg3[%c1640, %c0_108] : memref<2200x128xf32, #tpu.memory_space<vmem>>, vector<1x128xf32>
    %cst_109 = arith.constant dense<0.000000e+00> : vector<8x128xf32>
    %277 = tpu.matmul %274, %137, %cst_109 {dimension_numbers = #tpu.dot_dimension_numbers<[1], [0], [0], [1], [0, 0, 1, 1], [], []>} : vector<8x128xf32>, vector<128x128xf32>, vector<8x128xf32> -> vector<8x128xf32>
    %278 = arith.addf %277, %120 : vector<8x128xf32>
    %279 = vector.broadcast %276 : vector<1x128xf32> to vector<8x128xf32>
    %280 = arith.addf %278, %279 : vector<8x128xf32>
    %cst_110 = arith.constant 0.000000e+00 : f32
    %281 = vector.broadcast %cst_110 : f32 to vector<8x128xf32>
    %282 = arith.select %142, %280, %281 : vector<8x128xi1>, vector<8x128xf32>
    %283 = vector.broadcast %134 : vector<8x1xf32> to vector<8x128xf32>
    %284 = arith.mulf %283, %282 : vector<8x128xf32>
    %285 = arith.addf %274, %284 : vector<8x128xf32>
    %cst_111 = arith.constant 0.000000e+00 : f32
    %286 = vector.broadcast %cst_111 : f32 to vector<8x128xf32>
    %287 = arith.maximumf %280, %286 : vector<8x128xf32>
    %cst_112 = arith.constant dense<0.000000e+00> : vector<8x128xf32>
    %288 = tpu.matmul %287, %138, %cst_112 {dimension_numbers = #tpu.dot_dimension_numbers<[1], [0], [0], [1], [0, 0, 1, 1], [], []>} : vector<8x128xf32>, vector<128x128xf32>, vector<8x128xf32> -> vector<8x128xf32>
    %289 = arith.addf %285, %288 : vector<8x128xf32>
    %290 = vector.broadcast %139 : vector<1x128xf32> to vector<8x128xf32>
    %291 = arith.addf %289, %290 : vector<8x128xf32>
    %c1641 = arith.constant 1641 : index
    %c0_113 = arith.constant 0 : index
    %292 = vector.load %arg3[%c1641, %c0_113] : memref<2200x128xf32, #tpu.memory_space<vmem>>, vector<1x128xf32>
    %cst_114 = arith.constant dense<0.000000e+00> : vector<8x128xf32>
    %293 = tpu.matmul %291, %137, %cst_114 {dimension_numbers = #tpu.dot_dimension_numbers<[1], [0], [0], [1], [0, 0, 1, 1], [], []>} : vector<8x128xf32>, vector<128x128xf32>, vector<8x128xf32> -> vector<8x128xf32>
    %294 = arith.addf %293, %120 : vector<8x128xf32>
    %295 = vector.broadcast %292 : vector<1x128xf32> to vector<8x128xf32>
    %296 = arith.addf %294, %295 : vector<8x128xf32>
    %cst_115 = arith.constant 0.000000e+00 : f32
    %297 = vector.broadcast %cst_115 : f32 to vector<8x128xf32>
    %298 = arith.select %142, %296, %297 : vector<8x128xi1>, vector<8x128xf32>
    %299 = vector.broadcast %134 : vector<8x1xf32> to vector<8x128xf32>
    %300 = arith.mulf %299, %298 : vector<8x128xf32>
    %301 = arith.addf %291, %300 : vector<8x128xf32>
    %cst_116 = arith.constant 0.000000e+00 : f32
    %302 = vector.broadcast %cst_116 : f32 to vector<8x128xf32>
    %303 = arith.maximumf %296, %302 : vector<8x128xf32>
    %cst_117 = arith.constant dense<0.000000e+00> : vector<8x128xf32>
    %304 = tpu.matmul %303, %138, %cst_117 {dimension_numbers = #tpu.dot_dimension_numbers<[1], [0], [0], [1], [0, 0, 1, 1], [], []>} : vector<8x128xf32>, vector<128x128xf32>, vector<8x128xf32> -> vector<8x128xf32>
    %305 = arith.addf %301, %304 : vector<8x128xf32>
    %306 = vector.broadcast %139 : vector<1x128xf32> to vector<8x128xf32>
    %307 = arith.addf %305, %306 : vector<8x128xf32>
    %308 = vector.extract_strided_slice %307 {offsets = [0, 0], sizes = [8, 16], strides = [1, 1]} : vector<8x128xf32> to vector<8x16xf32>
    %c1642 = arith.constant 1642 : index
    %c0_118 = arith.constant 0 : index
    %309 = vector.load %arg3[%c1642, %c0_118] : memref<2200x128xf32, #tpu.memory_space<vmem>>, vector<1x128xf32>
    %cst_119 = arith.constant dense<0.000000e+00> : vector<8x128xf32>
    %310 = tpu.matmul %307, %137, %cst_119 {dimension_numbers = #tpu.dot_dimension_numbers<[1], [0], [0], [1], [0, 0, 1, 1], [], []>} : vector<8x128xf32>, vector<128x128xf32>, vector<8x128xf32> -> vector<8x128xf32>
    %311 = arith.addf %310, %120 : vector<8x128xf32>
    %312 = vector.broadcast %309 : vector<1x128xf32> to vector<8x128xf32>
    %313 = arith.addf %311, %312 : vector<8x128xf32>
    %cst_120 = arith.constant 0.000000e+00 : f32
    %314 = vector.broadcast %cst_120 : f32 to vector<8x128xf32>
    %315 = arith.select %142, %313, %314 : vector<8x128xi1>, vector<8x128xf32>
    %316 = vector.broadcast %134 : vector<8x1xf32> to vector<8x128xf32>
    %317 = arith.mulf %316, %315 : vector<8x128xf32>
    %318 = arith.addf %307, %317 : vector<8x128xf32>
    %cst_121 = arith.constant 0.000000e+00 : f32
    %319 = vector.broadcast %cst_121 : f32 to vector<8x128xf32>
    %320 = arith.maximumf %313, %319 : vector<8x128xf32>
    %cst_122 = arith.constant dense<0.000000e+00> : vector<8x128xf32>
    %321 = tpu.matmul %320, %138, %cst_122 {dimension_numbers = #tpu.dot_dimension_numbers<[1], [0], [0], [1], [0, 0, 1, 1], [], []>} : vector<8x128xf32>, vector<128x128xf32>, vector<8x128xf32> -> vector<8x128xf32>
    %322 = arith.addf %318, %321 : vector<8x128xf32>
    %323 = vector.broadcast %139 : vector<1x128xf32> to vector<8x128xf32>
    %324 = arith.addf %322, %323 : vector<8x128xf32>
    %c1643 = arith.constant 1643 : index
    %c0_123 = arith.constant 0 : index
    %325 = vector.load %arg3[%c1643, %c0_123] : memref<2200x128xf32, #tpu.memory_space<vmem>>, vector<1x128xf32>
    %cst_124 = arith.constant dense<0.000000e+00> : vector<8x128xf32>
    %326 = tpu.matmul %324, %137, %cst_124 {dimension_numbers = #tpu.dot_dimension_numbers<[1], [0], [0], [1], [0, 0, 1, 1], [], []>} : vector<8x128xf32>, vector<128x128xf32>, vector<8x128xf32> -> vector<8x128xf32>
    %327 = arith.addf %326, %120 : vector<8x128xf32>
    %328 = vector.broadcast %325 : vector<1x128xf32> to vector<8x128xf32>
    %329 = arith.addf %327, %328 : vector<8x128xf32>
    %cst_125 = arith.constant 0.000000e+00 : f32
    %330 = vector.broadcast %cst_125 : f32 to vector<8x128xf32>
    %331 = arith.select %142, %329, %330 : vector<8x128xi1>, vector<8x128xf32>
    %332 = vector.broadcast %134 : vector<8x1xf32> to vector<8x128xf32>
    %333 = arith.mulf %332, %331 : vector<8x128xf32>
    %334 = arith.addf %324, %333 : vector<8x128xf32>
    %cst_126 = arith.constant 0.000000e+00 : f32
    %335 = vector.broadcast %cst_126 : f32 to vector<8x128xf32>
    %336 = arith.maximumf %329, %335 : vector<8x128xf32>
    %cst_127 = arith.constant dense<0.000000e+00> : vector<8x128xf32>
    %337 = tpu.matmul %336, %138, %cst_127 {dimension_numbers = #tpu.dot_dimension_numbers<[1], [0], [0], [1], [0, 0, 1, 1], [], []>} : vector<8x128xf32>, vector<128x128xf32>, vector<8x128xf32> -> vector<8x128xf32>
    %338 = arith.addf %334, %337 : vector<8x128xf32>
    %339 = vector.broadcast %139 : vector<1x128xf32> to vector<8x128xf32>
    %340 = arith.addf %338, %339 : vector<8x128xf32>
    %341 = vector.extract_strided_slice %340 {offsets = [0, 0], sizes = [8, 16], strides = [1, 1]} : vector<8x128xf32> to vector<8x16xf32>
    %c1644 = arith.constant 1644 : index
    %c0_128 = arith.constant 0 : index
    %342 = vector.load %arg3[%c1644, %c0_128] : memref<2200x128xf32, #tpu.memory_space<vmem>>, vector<1x128xf32>
    %cst_129 = arith.constant dense<0.000000e+00> : vector<8x128xf32>
    %343 = tpu.matmul %340, %137, %cst_129 {dimension_numbers = #tpu.dot_dimension_numbers<[1], [0], [0], [1], [0, 0, 1, 1], [], []>} : vector<8x128xf32>, vector<128x128xf32>, vector<8x128xf32> -> vector<8x128xf32>
    %344 = arith.addf %343, %120 : vector<8x128xf32>
    %345 = vector.broadcast %342 : vector<1x128xf32> to vector<8x128xf32>
    %346 = arith.addf %344, %345 : vector<8x128xf32>
    %cst_130 = arith.constant 0.000000e+00 : f32
    %347 = vector.broadcast %cst_130 : f32 to vector<8x128xf32>
    %348 = arith.select %142, %346, %347 : vector<8x128xi1>, vector<8x128xf32>
    %349 = vector.broadcast %134 : vector<8x1xf32> to vector<8x128xf32>
    %350 = arith.mulf %349, %348 : vector<8x128xf32>
    %351 = arith.addf %340, %350 : vector<8x128xf32>
    %cst_131 = arith.constant 0.000000e+00 : f32
    %352 = vector.broadcast %cst_131 : f32 to vector<8x128xf32>
    %353 = arith.maximumf %346, %352 : vector<8x128xf32>
    %cst_132 = arith.constant dense<0.000000e+00> : vector<8x128xf32>
    %354 = tpu.matmul %353, %138, %cst_132 {dimension_numbers = #tpu.dot_dimension_numbers<[1], [0], [0], [1], [0, 0, 1, 1], [], []>} : vector<8x128xf32>, vector<128x128xf32>, vector<8x128xf32> -> vector<8x128xf32>
    %355 = arith.addf %351, %354 : vector<8x128xf32>
    %356 = vector.broadcast %139 : vector<1x128xf32> to vector<8x128xf32>
    %357 = arith.addf %355, %356 : vector<8x128xf32>
    %c1645 = arith.constant 1645 : index
    %c0_133 = arith.constant 0 : index
    %358 = vector.load %arg3[%c1645, %c0_133] : memref<2200x128xf32, #tpu.memory_space<vmem>>, vector<1x128xf32>
    %cst_134 = arith.constant dense<0.000000e+00> : vector<8x128xf32>
    %359 = tpu.matmul %357, %137, %cst_134 {dimension_numbers = #tpu.dot_dimension_numbers<[1], [0], [0], [1], [0, 0, 1, 1], [], []>} : vector<8x128xf32>, vector<128x128xf32>, vector<8x128xf32> -> vector<8x128xf32>
    %360 = arith.addf %359, %120 : vector<8x128xf32>
    %361 = vector.broadcast %358 : vector<1x128xf32> to vector<8x128xf32>
    %362 = arith.addf %360, %361 : vector<8x128xf32>
    %cst_135 = arith.constant 0.000000e+00 : f32
    %363 = vector.broadcast %cst_135 : f32 to vector<8x128xf32>
    %364 = arith.select %142, %362, %363 : vector<8x128xi1>, vector<8x128xf32>
    %365 = vector.broadcast %134 : vector<8x1xf32> to vector<8x128xf32>
    %366 = arith.mulf %365, %364 : vector<8x128xf32>
    %367 = arith.addf %357, %366 : vector<8x128xf32>
    %cst_136 = arith.constant 0.000000e+00 : f32
    %368 = vector.broadcast %cst_136 : f32 to vector<8x128xf32>
    %369 = arith.maximumf %362, %368 : vector<8x128xf32>
    %cst_137 = arith.constant dense<0.000000e+00> : vector<8x128xf32>
    %370 = tpu.matmul %369, %138, %cst_137 {dimension_numbers = #tpu.dot_dimension_numbers<[1], [0], [0], [1], [0, 0, 1, 1], [], []>} : vector<8x128xf32>, vector<128x128xf32>, vector<8x128xf32> -> vector<8x128xf32>
    %371 = arith.addf %367, %370 : vector<8x128xf32>
    %372 = vector.broadcast %139 : vector<1x128xf32> to vector<8x128xf32>
    %373 = arith.addf %371, %372 : vector<8x128xf32>
    %374 = vector.extract_strided_slice %373 {offsets = [0, 0], sizes = [8, 16], strides = [1, 1]} : vector<8x128xf32> to vector<8x16xf32>
    %375 = tpu.concatenate %143, %176, %209, %242, %275, %308, %341, %374 in 1 : vector<8x16xf32>, vector<8x16xf32>, vector<8x16xf32>, vector<8x16xf32>, vector<8x16xf32>, vector<8x16xf32>, vector<8x16xf32>, vector<8x16xf32> -> vector<8x128xf32>
    %c1912 = arith.constant 1912 : index
    %c0_138 = arith.constant 0 : index
    %376 = vector.load %arg3[%c1912, %c0_138] : memref<2200x128xf32, #tpu.memory_space<vmem>>, vector<128x128xf32>
    %cst_139 = arith.constant dense<0.000000e+00> : vector<8x128xf32>
    %377 = tpu.matmul %375, %376, %cst_139 {dimension_numbers = #tpu.dot_dimension_numbers<[1], [0], [0], [1], [0, 0, 1, 1], [], []>} : vector<8x128xf32>, vector<128x128xf32>, vector<8x128xf32> -> vector<8x128xf32>
    %378 = arith.addf %132, %377 : vector<8x128xf32>
    %c0_140 = arith.constant 0 : index
    %c0_141 = arith.constant 0 : index
    %379 = vector.load %arg4[%c0_140, %c0_141] : memref<8x128xf32, #tpu.memory_space<vmem>>, vector<8x128xf32>
    tpu.vector_store %arg4[%c0_140, %c0_141], %378 {strides = array<i32>} : memref<8x128xf32, #tpu.memory_space<vmem>>, vector<8x128xf32>,
    return
  }
  func.func @transform_0(%arg0: i32) -> (i32, i32) {
    %c0_i32 = arith.constant 0 : i32
    %c0_i32_0 = arith.constant 0 : i32
    return %arg0, %c0_i32 : i32, i32
  }
  func.func @transform_1(%arg0: i32) -> (i32, i32) {
    %c0_i32 = arith.constant 0 : i32
    %c0_i32_0 = arith.constant 0 : i32
    return %arg0, %c0_i32 : i32, i32
  }
  func.func @transform_2(%arg0: i32) -> (i32, i32) {
    %c0_i32 = arith.constant 0 : i32
    %c0_i32_0 = arith.constant 0 : i32
    %c0_i32_1 = arith.constant 0 : i32
    return %c0_i32, %c0_i32_0 : i32, i32
  }
  func.func @transform_3(%arg0: i32) -> (i32, i32) {
    %c0_i32 = arith.constant 0 : i32
    %c0_i32_0 = arith.constant 0 : i32
    return %arg0, %c0_i32 : i32, i32
  }
  func.func @transform_4(%arg0: i32) -> (i32, i32) {
    %c0_i32 = arith.constant 0 : i32
    %c0_i32_0 = arith.constant 0 : i32
    return %arg0, %c0_i32 : i32, i32
  }
}

</mosaic_0001>

<llo_original>
// kernel: _lambda_.1
$region0: #{_lambda_.1}
  #allocation0 [shape = 'u32[]', space=smem, size = 0x4, offset = 0x4, fixed_abs, tag = 'smem constant byte address 0x4 - core index']
  #allocation1 [shape = 'u32[72,128]{1,0:T(1,128)}', space=vmem, size = 0x9000, scoped, tag = 'internal scratch']
  %s0 = inlined_call_operand.vmem [shape: f32[8,128], index: 0, kind: input, shape index: {}]
  %s1 = inlined_call_operand.vmem [shape: f32[8,16], index: 1, kind: input, shape index: {}]
  %s2 = inlined_call_operand.hbm [shape: f32[2200,128], index: 2, kind: input, shape index: {}]
  %s3 = inlined_call_operand.vmem [shape: f32[8,128], index: 3, kind: output, shape index: {0}]
  %s4 = inlined_call_operand.vmem [shape: f32[8,128], index: 4, kind: output, shape index: {1}]
  %5 = xla_tuple %s3, %s4
  %s6 = sld [smem:[#allocation0]]
  $region34: #{_lambda_.1} parent=0
    _
  %s8 = ssub.s32 1, %s6
  %s9 = scalar_select 0, %s8, %s6
  $region1: #{_lambda_.1} parent=0
    #allocation2 [shape = 'u8[1126400]{0}', space=vmem, size = 0x113000, scoped, tag = 'input window, operand 2, single buffered']
    #allocation3 [shape = 's32[1]{0}', space=sflag, size = 0x4, scoped, tag = 'scoped memory for _lambda_.1']
    %10 = vsyncpa [#allocation3], 0
    // Predicated region
    $region2: #{_lambda_.1} parent=1 // pred_check
      _
    $region3: #{_lambda_.1} parent=1 // pred_check_branch
      %12 = sbr.rel (0) target = $region5
    $region4: #{_lambda_.1} parent=1 // pred_region
      _
    $region5: #{_lambda_.1} parent=1 // pred_fallthru
      _
    // Predicated region
    $region6: #{_lambda_.1} parent=1 // pred_check
      _
    $region7: #{_lambda_.1} parent=1 // pred_check_branch
      %14 = sbr.rel (0) target = $region9
    $region8: #{_lambda_.1} parent=1 // pred_region
      _
    $region9: #{_lambda_.1} parent=1 // pred_fallthru
      _
    // Predicated region
    $region10: #{_lambda_.1} parent=1 // pred_check
      _
    $region11: #{_lambda_.1} parent=1 // pred_check_branch
      %16 = sbr.rel (0) target = $region13
    $region12: #{_lambda_.1} parent=1 // pred_region
      %18 = vsyncadd [#allocation3], 0
      %s19 = sshll.u32 %s2, 4
      %s20 = int_to_ptr.hbm [resolvable:$true] %s19
      %s21 = sshll.u32 [#allocation2], 4
      %s22 = int_to_ptr.vmem [resolvable:$true] %s21
      %27 = dma.hbm_to_vmem [thread:$0]  %s20, 35200, %s22, [#allocation3], 128, 128, 8
    $region13: #{_lambda_.1} parent=1 // pred_fallthru
      _
    // Predicated region
    $region14: #{_lambda_.1} parent=1 // pred_check
      _
    $region15: #{_lambda_.1} parent=1 // pred_check_branch
      %29 = sbr.rel (0) target = $region17
    $region16: #{_lambda_.1} parent=1 // pred_region
      %31 = dma.done [#allocation3], 35200
    $region17: #{_lambda_.1} parent=1 // pred_fallthru
      _
    %v32 = vld [vmem:[%s0] sm:$0xff]
    %v33 = vld [vmem:[%s1] sm:$0xff]
    %v34 = vld [vmem:[#allocation2] sm:$0xff]
    %v35 = vld [vmem:[#allocation2 + $0x8] sm:$0xff]
    %v36 = vld [vmem:[#allocation2 + $0x10] sm:$0xff]
    %v37 = vld [vmem:[#allocation2 + $0x18] sm:$0xff]
    %v38 = vld [vmem:[#allocation2 + $0x20] sm:$0xff]
    %v39 = vld [vmem:[#allocation2 + $0x28] sm:$0xff]
    %v40 = vld [vmem:[#allocation2 + $0x30] sm:$0xff]
    %v41 = vld [vmem:[#allocation2 + $0x38] sm:$0xff]
    %v42 = vld [vmem:[#allocation2 + $0x40] sm:$0xff]
    %v43 = vld [vmem:[#allocation2 + $0x48] sm:$0xff]
    %v44 = vld [vmem:[#allocation2 + $0x50] sm:$0xff]
    %v45 = vld [vmem:[#allocation2 + $0x58] sm:$0xff]
    %v46 = vld [vmem:[#allocation2 + $0x60] sm:$0xff]
    %v47 = vld [vmem:[#allocation2 + $0x68] sm:$0xff]
    %v48 = vld [vmem:[#allocation2 + $0x70] sm:$0xff]
    %v49 = vld [vmem:[#allocation2 + $0x78] sm:$0xff]
    %v50 = vld [vmem:[#allocation2 + $0x80] sm:$0x1]
    %v51 = vperm.slane %v50, 0
    %52 = vmatpush.msra.mxu0 %v49
    %53 = vmatpush.msra.mxu0 %v48
    %54 = vmatpush.msra.mxu0 %v47
    %55 = vmatpush.msra.mxu0 %v46
    %56 = vmatpush.msra.mxu0 %v45
    %57 = vmatpush.msra.mxu0 %v44
    %58 = vmatpush.msra.mxu0 %v43
    %59 = vmatpush.msra.mxu0 %v42
    %60 = vmatpush.msra.mxu0 %v41
    %61 = vmatpush.msra.mxu0 %v40
    %62 = vmatpush.msra.mxu0 %v39
    %63 = vmatpush.msra.mxu0 %v38
    %64 = vmatpush.msra.mxu0 %v37
    %65 = vmatpush.msra.mxu0 %v36
    %66 = vmatpush.msra.mxu0 %v35
    %67 = vmatpush.msra.mxu0 %v34
    %68 = vmatmul.f32.gmra.mxu0 %v32
    %v69 = vpop.f32.mrf.mxu0
    %v70 = vadd.f32 %v51, %v69
    %71 = vdwg.mxu0
    %v72 = vmax.f32 %v70, 0.0
    %v73 = vld [vmem:[#allocation2 + $0x88] sm:$0xff]
    %v74 = vld [vmem:[#allocation2 + $0x90] sm:$0xff]
    %v75 = vld [vmem:[#allocation2 + $0x98] sm:$0xff]
    %v76 = vld [vmem:[#allocation2 + $0xa0] sm:$0xff]
    %v77 = vld [vmem:[#allocation2 + $0xa8] sm:$0xff]
    %v78 = vld [vmem:[#allocation2 + $0xb0] sm:$0xff]
    %v79 = vld [vmem:[#allocation2 + $0xb8] sm:$0xff]
    %v80 = vld [vmem:[#allocation2 + $0xc0] sm:$0xff]
    %v81 = vld [vmem:[#allocation2 + $0xc8] sm:$0xff]
    %v82 = vld [vmem:[#allocation2 + $0xd0] sm:$0xff]
    %v83 = vld [vmem:[#allocation2 + $0xd8] sm:$0xff]
    %v84 = vld [vmem:[#allocation2 + $0xe0] sm:$0xff]
    %v85 = vld [vmem:[#allocation2 + $0xe8] sm:$0xff]
    %v86 = vld [vmem:[#allocation2 + $0xf0] sm:$0xff]
    %v87 = vld [vmem:[#allocation2 + $0xf8] sm:$0xff]
    %v88 = vld [vmem:[#allocation2 + $0x100] sm:$0xff]
    %v89 = vld [vmem:[#allocation2 + $0x108] sm:$0x1]
    %v90 = vperm.slane %v89, 0
    %91 = vmatpush.msra.mxu0 %v88
    %92 = vmatpush.msra.mxu0 %v87
    %93 = vmatpush.msra.mxu0 %v86
    %94 = vmatpush.msra.mxu0 %v85
    %95 = vmatpush.msra.mxu0 %v84
    %96 = vmatpush.msra.mxu0 %v83
    %97 = vmatpush.msra.mxu0 %v82
    %98 = vmatpush.msra.mxu0 %v81
    %99 = vmatpush.msra.mxu0 %v80
    %100 = vmatpush.msra.mxu0 %v79
    %101 = vmatpush.msra.mxu0 %v78
    %102 = vmatpush.msra.mxu0 %v77
    %103 = vmatpush.msra.mxu0 %v76
    %104 = vmatpush.msra.mxu0 %v75
    %105 = vmatpush.msra.mxu0 %v74
    %106 = vmatpush.msra.mxu0 %v73
    %107 = vmatmul.f32.gmra.mxu0 %v72
    %v108 = vpop.f32.mrf.mxu0
    %v109 = vadd.f32 %v90, %v108
    %110 = vdwg.mxu0
    %v111 = vmax.f32 %v109, 0.0
    %v112 = vld [vmem:[#allocation2 + $0x110] sm:$0xff]
    %v113 = vld [vmem:[#allocation2 + $0x118] sm:$0xff]
    %v114 = vld [vmem:[#allocation2 + $0x120] sm:$0xff]
    %v115 = vld [vmem:[#allocation2 + $0x128] sm:$0xff]
    %v116 = vld [vmem:[#allocation2 + $0x130] sm:$0xff]
    %v117 = vld [vmem:[#allocation2 + $0x138] sm:$0xff]
    %v118 = vld [vmem:[#allocation2 + $0x140] sm:$0xff]
    %v119 = vld [vmem:[#allocation2 + $0x148] sm:$0xff]
    %v120 = vld [vmem:[#allocation2 + $0x150] sm:$0xff]
    %v121 = vld [vmem:[#allocation2 + $0x158] sm:$0xff]
    %v122 = vld [vmem:[#allocation2 + $0x160] sm:$0xff]
    %v123 = vld [vmem:[#allocation2 + $0x168] sm:$0xff]
    %v124 = vld [vmem:[#allocation2 + $0x170] sm:$0xff]
    %v125 = vld [vmem:[#allocation2 + $0x178] sm:$0xff]
    %v126 = vld [vmem:[#allocation2 + $0x180] sm:$0xff]
    %v127 = vld [vmem:[#allocation2 + $0x188] sm:$0xff]
    %v128 = vld [vmem:[#allocation2 + $0x190] sm:$0x1]
    %v129 = vperm.slane %v128, 0
    %130 = vmatpush.msra.mxu0 %v127
    %131 = vmatpush.msra.mxu0 %v126
    %132 = vmatpush.msra.mxu0 %v125
    %133 = vmatpush.msra.mxu0 %v124
    %134 = vmatpush.msra.mxu0 %v123
    %135 = vmatpush.msra.mxu0 %v122
    %136 = vmatpush.msra.mxu0 %v121
    %137 = vmatpush.msra.mxu0 %v120
    %138 = vmatpush.msra.mxu0 %v119
    %139 = vmatpush.msra.mxu0 %v118
    %140 = vmatpush.msra.mxu0 %v117
    %141 = vmatpush.msra.mxu0 %v116
    %142 = vmatpush.msra.mxu0 %v115
    %143 = vmatpush.msra.mxu0 %v114
    %144 = vmatpush.msra.mxu0 %v113
    %145 = vmatpush.msra.mxu0 %v112
    %146 = vmatmul.f32.gmra.mxu0 %v111
    %v147 = vpop.f32.mrf.mxu0
    %v148 = vadd.f32 %v129, %v147
    %149 = vdwg.mxu0
    %v150 = vmax.f32 %v148, 0.0
    %v151 = vld [vmem:[#allocation2 + $0x198] sm:$0xff]
    %v152 = vld [vmem:[#allocation2 + $0x1a0] sm:$0xff]
    %v153 = vld [vmem:[#allocation2 + $0x1a8] sm:$0xff]
    %v154 = vld [vmem:[#allocation2 + $0x1b0] sm:$0xff]
    %v155 = vld [vmem:[#allocation2 + $0x1b8] sm:$0xff]
    %v156 = vld [vmem:[#allocation2 + $0x1c0] sm:$0xff]
    %v157 = vld [vmem:[#allocation2 + $0x1c8] sm:$0xff]
    %v158 = vld [vmem:[#allocation2 + $0x1d0] sm:$0xff]
    %v159 = vld [vmem:[#allocation2 + $0x1d8] sm:$0xff]
    %v160 = vld [vmem:[#allocation2 + $0x1e0] sm:$0xff]
    %v161 = vld [vmem:[#allocation2 + $0x1e8] sm:$0xff]
    %v162 = vld [vmem:[#allocation2 + $0x1f0] sm:$0xff]
    %v163 = vld [vmem:[#allocation2 + $0x1f8] sm:$0xff]
    %v164 = vld [vmem:[#allocation2 + $0x200] sm:$0xff]
    %v165 = vld [vmem:[#allocation2 + $0x208] sm:$0xff]
    %v166 = vld [vmem:[#allocation2 + $0x210] sm:$0xff]
    %v167 = vld [vmem:[#allocation2 + $0x218] sm:$0x1]
    %v168 = vperm.slane %v167, 0
    %169 = vmatpush.msra.mxu0 %v166
    %170 = vmatpush.msra.mxu0 %v165
    %171 = vmatpush.msra.mxu0 %v164
    %172 = vmatpush.msra.mxu0 %v163
    %173 = vmatpush.msra.mxu0 %v162
    %174 = vmatpush.msra.mxu0 %v161
    %175 = vmatpush.msra.mxu0 %v160
    %176 = vmatpush.msra.mxu0 %v159
    %177 = vmatpush.msra.mxu0 %v158
    %178 = vmatpush.msra.mxu0 %v157
    %179 = vmatpush.msra.mxu0 %v156
    %180 = vmatpush.msra.mxu0 %v155
    %181 = vmatpush.msra.mxu0 %v154
    %182 = vmatpush.msra.mxu0 %v153
    %183 = vmatpush.msra.mxu0 %v152
    %184 = vmatpush.msra.mxu0 %v151
    %185 = vmatmul.f32.gmra.mxu0 %v150
    %v186 = vpop.f32.mrf.mxu0
    %v187 = vadd.f32 %v168, %v186
    %188 = vdwg.mxu0
    %v189 = vld [vmem:[#allocation2 + $0x2a0] sm:$0xff]
    %v190 = vld [vmem:[#allocation2 + $0x2a8] sm:$0xff]
    %v191 = vld [vmem:[#allocation2 + $0x2b0] sm:$0xff]
    %v192 = vld [vmem:[#allocation2 + $0x2b8] sm:$0xff]
    %v193 = vld [vmem:[#allocation2 + $0x2c0] sm:$0xff]
    %v194 = vld [vmem:[#allocation2 + $0x2c8] sm:$0xff]
    %v195 = vld [vmem:[#allocation2 + $0x2d0] sm:$0xff]
    %v196 = vld [vmem:[#allocation2 + $0x2d8] sm:$0xff]
    %v197 = vld [vmem:[#allocation2 + $0x2e0] sm:$0xff]
    %v198 = vld [vmem:[#allocation2 + $0x2e8] sm:$0xff]
    %v199 = vld [vmem:[#allocation2 + $0x2f0] sm:$0xff]
    %v200 = vld [vmem:[#allocation2 + $0x2f8] sm:$0xff]
    %v201 = vld [vmem:[#allocation2 + $0x300] sm:$0xff]
    %v202 = vld [vmem:[#allocation2 + $0x308] sm:$0xff]
    %v203 = vld [vmem:[#allocation2 + $0x310] sm:$0xff]
    %v204 = vld [vmem:[#allocation2 + $0x318] sm:$0xff]
    %v205 = vld [vmem:[#allocation2 + $0x320] sm:$0x1]
    %v206 = vperm.slane %v205, 0
    %207 = vmatpush.msra.mxu0 %v204
    %208 = vmatpush.msra.mxu0 %v203
    %209 = vmatpush.msra.mxu0 %v202
    %210 = vmatpush.msra.mxu0 %v201
    %211 = vmatpush.msra.mxu0 %v200
    %212 = vmatpush.msra.mxu0 %v199
    %213 = vmatpush.msra.mxu0 %v198
    %214 = vmatpush.msra.mxu0 %v197
    %215 = vmatpush.msra.mxu0 %v196
    %216 = vmatpush.msra.mxu0 %v195
    %217 = vmatpush.msra.mxu0 %v194
    %218 = vmatpush.msra.mxu0 %v193
    %219 = vmatpush.msra.mxu0 %v192
    %220 = vmatpush.msra.mxu0 %v191
    %221 = vmatpush.msra.mxu0 %v190
    %222 = vmatpush.msra.mxu0 %v189
    %223 = vmatmul.f32.gmra.mxu0 %v187
    %v224 = vpop.f32.mrf.mxu0
    %v225 = vadd.f32 %v206, %v224
    %226 = vdwg.mxu0
    %v227 = vmax.f32 %v225, 0.0
    %v228 = vld [vmem:[#allocation2 + $0x220] sm:$0xff]
    %v229 = vld [vmem:[#allocation2 + $0x228] sm:$0xff]
    %v230 = vld [vmem:[#allocation2 + $0x230] sm:$0xff]
    %v231 = vld [vmem:[#allocation2 + $0x238] sm:$0xff]
    %v232 = vld [vmem:[#allocation2 + $0x240] sm:$0xff]
    %v233 = vld [vmem:[#allocation2 + $0x248] sm:$0xff]
    %v234 = vld [vmem:[#allocation2 + $0x250] sm:$0xff]
    %v235 = vld [vmem:[#allocation2 + $0x258] sm:$0xff]
    %v236 = vld [vmem:[#allocation2 + $0x260] sm:$0xff]
    %v237 = vld [vmem:[#allocation2 + $0x268] sm:$0xff]
    %v238 = vld [vmem:[#allocation2 + $0x270] sm:$0xff]
    %v239 = vld [vmem:[#allocation2 + $0x278] sm:$0xff]
    %v240 = vld [vmem:[#allocation2 + $0x280] sm:$0xff]
    %v241 = vld [vmem:[#allocation2 + $0x288] sm:$0xff]
    %v242 = vld [vmem:[#allocation2 + $0x290] sm:$0xff]
    %v243 = vld [vmem:[#allocation2 + $0x298] sm:$0xff]
    %v244 = vld [vmem:[#allocation2 + $0x328] sm:$0xff]
    %v245 = vld [vmem:[#allocation2 + $0x330] sm:$0xff]
    %v246 = vld [vmem:[#allocation2 + $0x338] sm:$0xff]
    %v247 = vld [vmem:[#allocation2 + $0x340] sm:$0xff]
    %v248 = vld [vmem:[#allocation2 + $0x348] sm:$0xff]
    %v249 = vld [vmem:[#allocation2 + $0x350] sm:$0xff]
    %v250 = vld [vmem:[#allocation2 + $0x358] sm:$0xff]
    %v251 = vld [vmem:[#allocation2 + $0x360] sm:$0xff]
    %v252 = vld [vmem:[#allocation2 + $0x368] sm:$0xff]
    %v253 = vld [vmem:[#allocation2 + $0x370] sm:$0xff]
    %v254 = vld [vmem:[#allocation2 + $0x378] sm:$0xff]
    %v255 = vld [vmem:[#allocation2 + $0x380] sm:$0xff]
    %v256 = vld [vmem:[#allocation2 + $0x388] sm:$0xff]
    %v257 = vld [vmem:[#allocation2 + $0x390] sm:$0xff]
    %v258 = vld [vmem:[#allocation2 + $0x398] sm:$0xff]
    %v259 = vld [vmem:[#allocation2 + $0x3a0] sm:$0xff]
    %260 = vmatpush.msra.mxu0 %v259
    %261 = vmatpush.msra.mxu0 %v258
    %262 = vmatpush.msra.mxu0 %v257
    %263 = vmatpush.msra.mxu0 %v256
    %264 = vmatpush.msra.mxu0 %v255
    %265 = vmatpush.msra.mxu0 %v254
    %266 = vmatpush.msra.mxu0 %v253
    %267 = vmatpush.msra.mxu0 %v252
    %268 = vmatpush.msra.mxu0 %v251
    %269 = vmatpush.msra.mxu0 %v250
    %270 = vmatpush.msra.mxu0 %v249
    %271 = vmatpush.msra.mxu0 %v248
    %272 = vmatpush.msra.mxu0 %v247
    %273 = vmatpush.msra.mxu0 %v246
    %274 = vmatpush.msra.mxu0 %v245
    %275 = vmatpush.msra.mxu0 %v244
    %276 = vmatmul.f32.gmra.mxu0 %v227
    %v277 = vpop.f32.mrf.mxu0
    %v278 = vadd.f32 0.0, %v277
    %279 = vdwg.mxu0
    %280 = vmatpush.msra.mxu0 %v243
    %281 = vmatpush.msra.mxu0 %v242
    %282 = vmatpush.msra.mxu0 %v241
    %283 = vmatpush.msra.mxu0 %v240
    %284 = vmatpush.msra.mxu0 %v239
    %285 = vmatpush.msra.mxu0 %v238
    %286 = vmatpush.msra.mxu0 %v237
    %287 = vmatpush.msra.mxu0 %v236
    %288 = vmatpush.msra.mxu0 %v235
    %289 = vmatpush.msra.mxu0 %v234
    %290 = vmatpush.msra.mxu0 %v233
    %291 = vmatpush.msra.mxu0 %v232
    %292 = vmatpush.msra.mxu0 %v231
    %293 = vmatpush.msra.mxu0 %v230
    %294 = vmatpush.msra.mxu0 %v229
    %295 = vmatpush.msra.mxu0 %v228
    %296 = vmatmul.f32.gmra.mxu0 %v32
    %v297 = vpop.f32.mrf.mxu0
    %v298 = vadd.f32 %v278, %v297
    %299 = vdwg.mxu0
    %v300 = vld [vmem:[#allocation2 + $0x3a8] sm:$0x1]
    %v301 = vperm.slane %v300, 0
    %v302 = vadd.f32 %v298, %v301
    %v303 = vld [vmem:[#allocation2 + $0x3b0] sm:$0xff]
    %v304 = vld [vmem:[#allocation2 + $0x3b8] sm:$0xff]
    %v305 = vld [vmem:[#allocation2 + $0x3c0] sm:$0xff]
    %v306 = vld [vmem:[#allocation2 + $0x3c8] sm:$0xff]
    %v307 = vld [vmem:[#allocation2 + $0x3d0] sm:$0xff]
    %v308 = vld [vmem:[#allocation2 + $0x3d8] sm:$0xff]
    %v309 = vld [vmem:[#allocation2 + $0x3e0] sm:$0xff]
    %v310 = vld [vmem:[#allocation2 + $0x3e8] sm:$0xff]
    %v311 = vld [vmem:[#allocation2 + $0x3f0] sm:$0xff]
    %v312 = vld [vmem:[#allocation2 + $0x3f8] sm:$0xff]
    %v313 = vld [vmem:[#allocation2 + $0x400] sm:$0xff]
    %v314 = vld [vmem:[#allocation2 + $0x408] sm:$0xff]
    %v315 = vld [vmem:[#allocation2 + $0x410] sm:$0xff]
    %v316 = vld [vmem:[#allocation2 + $0x418] sm:$0xff]
    %v317 = vld [vmem:[#allocation2 + $0x420] sm:$0xff]
    %v318 = vld [vmem:[#allocation2 + $0x428] sm:$0xff]
    %v319 = vld [vmem:[#allocation2 + $0x430] sm:$0x1]
    %v320 = vperm.slane %v319, 0
    %321 = vmatpush.msra.mxu0 %v318
    %322 = vmatpush.msra.mxu0 %v317
    %323 = vmatpush.msra.mxu0 %v316
    %324 = vmatpush.msra.mxu0 %v315
    %325 = vmatpush.msra.mxu0 %v314
    %326 = vmatpush.msra.mxu0 %v313
    %327 = vmatpush.msra.mxu0 %v312
    %328 = vmatpush.msra.mxu0 %v311
    %329 = vmatpush.msra.mxu0 %v310
    %330 = vmatpush.msra.mxu0 %v309
    %331 = vmatpush.msra.mxu0 %v308
    %332 = vmatpush.msra.mxu0 %v307
    %333 = vmatpush.msra.mxu0 %v306
    %334 = vmatpush.msra.mxu0 %v305
    %335 = vmatpush.msra.mxu0 %v304
    %336 = vmatpush.msra.mxu0 %v303
    %337 = vmatmul.f32.gmra.mxu0 %v302
    %v338 = vpop.f32.mrf.mxu0
    %v339 = vadd.f32 %v320, %v338
    %340 = vdwg.mxu0
    %v341 = vmax.f32 %v339, 0.0
    %v342 = vld [vmem:[#allocation2 + $0x438] sm:$0xff]
    %v343 = vld [vmem:[#allocation2 + $0x440] sm:$0xff]
    %v344 = vld [vmem:[#allocation2 + $0x448] sm:$0xff]
    %v345 = vld [vmem:[#allocation2 + $0x450] sm:$0xff]
    %v346 = vld [vmem:[#allocation2 + $0x458] sm:$0xff]
    %v347 = vld [vmem:[#allocation2 + $0x460] sm:$0xff]
    %v348 = vld [vmem:[#allocation2 + $0x468] sm:$0xff]
    %v349 = vld [vmem:[#allocation2 + $0x470] sm:$0xff]
    %v350 = vld [vmem:[#allocation2 + $0x478] sm:$0xff]
    %v351 = vld [vmem:[#allocation2 + $0x480] sm:$0xff]
    %v352 = vld [vmem:[#allocation2 + $0x488] sm:$0xff]
    %v353 = vld [vmem:[#allocation2 + $0x490] sm:$0xff]
    %v354 = vld [vmem:[#allocation2 + $0x498] sm:$0xff]
    %v355 = vld [vmem:[#allocation2 + $0x4a0] sm:$0xff]
    %v356 = vld [vmem:[#allocation2 + $0x4a8] sm:$0xff]
    %v357 = vld [vmem:[#allocation2 + $0x4b0] sm:$0xff]
    %v358 = vld [vmem:[#allocation2 + $0x4b8] sm:$0x1]
    %v359 = vperm.slane %v358, 0
    %360 = vmatpush.msra.mxu0 %v357
    %361 = vmatpush.msra.mxu0 %v356
    %362 = vmatpush.msra.mxu0 %v355
    %363 = vmatpush.msra.mxu0 %v354
    %364 = vmatpush.msra.mxu0 %v353
    %365 = vmatpush.msra.mxu0 %v352
    %366 = vmatpush.msra.mxu0 %v351
    %367 = vmatpush.msra.mxu0 %v350
    %368 = vmatpush.msra.mxu0 %v349
    %369 = vmatpush.msra.mxu0 %v348
    %370 = vmatpush.msra.mxu0 %v347
    %371 = vmatpush.msra.mxu0 %v346
    %372 = vmatpush.msra.mxu0 %v345
    %373 = vmatpush.msra.mxu0 %v344
    %374 = vmatpush.msra.mxu0 %v343
    %375 = vmatpush.msra.mxu0 %v342
    %376 = vmatmul.f32.gmra.mxu0 %v341
    %v377 = vpop.f32.mrf.mxu0
    %v378 = vadd.f32 %v359, %v377
    %379 = vdwg.mxu0
    %v380 = vmax.f32 %v378, 0.0
    %v381 = vld [vmem:[#allocation2 + $0x4c0] sm:$0xff]
    %v382 = vld [vmem:[#allocation2 + $0x4c8] sm:$0xff]
    %v383 = vld [vmem:[#allocation2 + $0x4d0] sm:$0xff]
    %v384 = vld [vmem:[#allocation2 + $0x4d8] sm:$0xff]
    %v385 = vld [vmem:[#allocation2 + $0x4e0] sm:$0xff]
    %v386 = vld [vmem:[#allocation2 + $0x4e8] sm:$0xff]
    %v387 = vld [vmem:[#allocation2 + $0x4f0] sm:$0xff]
    %v388 = vld [vmem:[#allocation2 + $0x4f8] sm:$0xff]
    %v389 = vld [vmem:[#allocation2 + $0x500] sm:$0xff]
    %v390 = vld [vmem:[#allocation2 + $0x508] sm:$0xff]
    %v391 = vld [vmem:[#allocation2 + $0x510] sm:$0xff]
    %v392 = vld [vmem:[#allocation2 + $0x518] sm:$0xff]
    %v393 = vld [vmem:[#allocation2 + $0x520] sm:$0xff]
    %v394 = vld [vmem:[#allocation2 + $0x528] sm:$0xff]
    %v395 = vld [vmem:[#allocation2 + $0x530] sm:$0xff]
    %v396 = vld [vmem:[#allocation2 + $0x538] sm:$0xff]
    %v397 = vld [vmem:[#allocation2 + $0x540] sm:$0x1]
    %v398 = vperm.slane %v397, 0
    %399 = vmatpush.msra.mxu0 %v396
    %400 = vmatpush.msra.mxu0 %v395
    %401 = vmatpush.msra.mxu0 %v394
    %402 = vmatpush.msra.mxu0 %v393
    %403 = vmatpush.msra.mxu0 %v392
    %404 = vmatpush.msra.mxu0 %v391
    %405 = vmatpush.msra.mxu0 %v390
    %406 = vmatpush.msra.mxu0 %v389
    %407 = vmatpush.msra.mxu0 %v388
    %408 = vmatpush.msra.mxu0 %v387
    %409 = vmatpush.msra.mxu0 %v386
    %410 = vmatpush.msra.mxu0 %v385
    %411 = vmatpush.msra.mxu0 %v384
    %412 = vmatpush.msra.mxu0 %v383
    %413 = vmatpush.msra.mxu0 %v382
    %414 = vmatpush.msra.mxu0 %v381
    %415 = vmatmul.f32.gmra.mxu0 %v380
    %v416 = vpop.f32.mrf.mxu0
    %v417 = vadd.f32 %v398, %v416
    %418 = vdwg.mxu0
    %v419 = vmax.f32 %v417, 0.0
    %v420 = vld [vmem:[#allocation2 + $0x548] sm:$0xff]
    %v421 = vld [vmem:[#allocation2 + $0x550] sm:$0xff]
    %v422 = vld [vmem:[#allocation2 + $0x558] sm:$0xff]
    %v423 = vld [vmem:[#allocation2 + $0x560] sm:$0xff]
    %v424 = vld [vmem:[#allocation2 + $0x568] sm:$0xff]
    %v425 = vld [vmem:[#allocation2 + $0x570] sm:$0xff]
    %v426 = vld [vmem:[#allocation2 + $0x578] sm:$0xff]
    %v427 = vld [vmem:[#allocation2 + $0x580] sm:$0xff]
    %v428 = vld [vmem:[#allocation2 + $0x588] sm:$0xff]
    %v429 = vld [vmem:[#allocation2 + $0x590] sm:$0xff]
    %v430 = vld [vmem:[#allocation2 + $0x598] sm:$0xff]
    %v431 = vld [vmem:[#allocation2 + $0x5a0] sm:$0xff]
    %v432 = vld [vmem:[#allocation2 + $0x5a8] sm:$0xff]
    %v433 = vld [vmem:[#allocation2 + $0x5b0] sm:$0xff]
    %v434 = vld [vmem:[#allocation2 + $0x5b8] sm:$0xff]
    %v435 = vld [vmem:[#allocation2 + $0x5c0] sm:$0xff]
    %v436 = vld [vmem:[#allocation2 + $0x5c8] sm:$0x1]
    %v437 = vperm.slane %v436, 0
    %438 = vmatpush.msra.mxu0 %v435
    %439 = vmatpush.msra.mxu0 %v434
    %440 = vmatpush.msra.mxu0 %v433
    %441 = vmatpush.msra.mxu0 %v432
    %442 = vmatpush.msra.mxu0 %v431
    %443 = vmatpush.msra.mxu0 %v430
    %444 = vmatpush.msra.mxu0 %v429
    %445 = vmatpush.msra.mxu0 %v428
    %446 = vmatpush.msra.mxu0 %v427
    %447 = vmatpush.msra.mxu0 %v426
    %448 = vmatpush.msra.mxu0 %v425
    %449 = vmatpush.msra.mxu0 %v424
    %450 = vmatpush.msra.mxu0 %v423
    %451 = vmatpush.msra.mxu0 %v422
    %452 = vmatpush.msra.mxu0 %v421
    %453 = vmatpush.msra.mxu0 %v420
    %454 = vmatmul.f32.gmra.mxu0 %v419
    %v455 = vpop.f32.mrf.mxu0
    %v456 = vadd.f32 %v437, %v455
    %457 = vdwg.mxu0
    %v458 = vlaneseq
    %v459 = vand.u32 %v458, 127
    %vm460 = vcmp.eq.s32.totalorder %v459, 16
    %v461 = vmax.f32 %v456, 0.0
    %vm462 = vcmp.ne.f32.partialorder %v456, %v456
    %v463 = vadd.f32 %v456, 0.0
    %v464 = vand.u32 2147483647, %v456
    %v465 = vsub.f32 0.0, %v464
    %v466 = vmul.f32 %v465, 1.442695
    %v467 = vpow.pop %v466
    %v468 = vadd.f32 %v467, 1.0
    %v469 = vlog2.pop %v468
    %v470 = vmul.f32 %v469, 0.6931472
    %v471 = vmul.f32 -0.5, %v467
    %v472 = vadd.f32 %v471, 1.0
    %v473 = vmul.f32 %v472, %v467
    %v474 = vand.u32 2147483647, %v467
    %vm475 = vcmp.lt.f32.partialorder %v474, 0.0004427343
    %v476 = vsel %vm475, %v473, %v470
    %v477 = vadd.f32 %v461, %v476
    %v478 = vsel %vm462, %v463, %v477
    %v479 = vsel %vm460, %v478, %v456
    %v480 = vadd.f32 %v187, %v479
    %481 = vst [vmem:[%s4] sm:$0xff] %v480
    %v482 = vmul.f32 %v479, 0.5
    %v483 = vmul.f32 %v482, 1.442695
    %v484 = vpow.pop %v483
    %486 = vrot.lane.b32.xlu0 %v33, 17
    %v487 = vpop.permute.xlu0 %486
    %v489 = vmul.f32 %v484, %v487
    %491 = vrot.lane.b32.xlu0 %v489, 127
    %v492 = vpop.permute.xlu0 %491
    %v494 = vadd.f32 %v479, %v492
    %v495 = vmax.f32 %v494, 0.005
    %v496 = vmin.f32 %v495, 0.2
    %v497 = vmul.f32 %v187, 0.5
    %v498 = vmul.f32 %v497, 1.442695
    %v499 = vpow.pop %v498
    %500 = vrot.lane.b32.xlu0 %v33, 3
    %v501 = vpop.permute.xlu0 %500
    %v503 = vmul.f32 %v499, %v501
    %505 = vrot.lane.b32.xlu0 %v503, 124
    %v506 = vpop.permute.xlu0 %505
    %v508 = vadd.f32 %v187, %v506
    %509 = vrot.lane.b32.xlu0 %v33, 7
    %v510 = vpop.permute.xlu0 %509
    %v512 = vmul.f32 %v499, %v510
    %514 = vrot.lane.b32.xlu0 %v512, 124
    %v515 = vpop.permute.xlu0 %514
    %v517 = vadd.f32 %v187, %v515
    %519 = vrot.lane.b32.xlu0 %v496, 112
    %v520 = vpop.permute.xlu0 %519
    %523 = vrot.lane.b32.xlu0 %v508, 1
    %v524 = vpop.permute.xlu0 %523
    %527 = vrot.lane.b32.xlu0 %v517, 125
    %v528 = vpop.permute.xlu0 %527
    %vm530 = vcmask 7168
    %v531 = vsel %vm530, %v520, %v524
    %vm532 = vcmask 39936
    %v533 = vsel %vm532, %v531, %v528
    %vm534 = vcmask 72704
    %v535 = vsel %vm534, %v533, 0.0
    %v536 = vld [vmem:[#allocation2 + $0x650] sm:$0xff]
    %v537 = vld [vmem:[#allocation2 + $0x658] sm:$0xff]
    %vm538 = vcmask 130048
    %v540 = vsel %vm538, %v535, 0
    %542 = vmatpush.msra.mxu0 0.0
    %543 = vmatpush.msra.mxu0 0.0
    %544 = vmatpush.msra.mxu0 0.0
    %545 = vmatpush.msra.mxu0 0.0
    %546 = vmatpush.msra.mxu0 0.0
    %547 = vmatpush.msra.mxu0 0.0
    %548 = vmatpush.msra.mxu0 0.0
    %549 = vmatpush.msra.mxu0 0.0
    %550 = vmatpush.msra.mxu0 0.0
    %551 = vmatpush.msra.mxu0 0.0
    %552 = vmatpush.msra.mxu0 0.0
    %553 = vmatpush.msra.mxu0 0.0
    %554 = vmatpush.msra.mxu0 0.0
    %555 = vmatpush.msra.mxu0 0.0
    %556 = vmatpush.msra.mxu0 %v537
    %557 = vmatpush.msra.mxu0 %v536
    %558 = vmatmul.f32.gmra.mxu0 %v540
    %v559 = vpop.f32.mrf.mxu0
    %v560 = vadd.f32 0.0, %v559
    %561 = vdwg.mxu0
    %v562 = vld [vmem:[#allocation2 + $0x7f8] sm:$0xff]
    %v563 = vld [vmem:[#allocation2 + $0x800] sm:$0xff]
    %v564 = vld [vmem:[#allocation2 + $0x808] sm:$0x1]
    %v565 = vperm.slane %v564, 0
    %566 = vmatpush.msra.mxu0 0.0
    %567 = vmatpush.msra.mxu0 0.0
    %568 = vmatpush.msra.mxu0 0.0
    %569 = vmatpush.msra.mxu0 0.0
    %570 = vmatpush.msra.mxu0 0.0
    %571 = vmatpush.msra.mxu0 0.0
    %572 = vmatpush.msra.mxu0 0.0
    %573 = vmatpush.msra.mxu0 0.0
    %574 = vmatpush.msra.mxu0 0.0
    %575 = vmatpush.msra.mxu0 0.0
    %576 = vmatpush.msra.mxu0 0.0
    %577 = vmatpush.msra.mxu0 0.0
    %578 = vmatpush.msra.mxu0 0.0
    %579 = vmatpush.msra.mxu0 0.0
    %580 = vmatpush.msra.mxu0 %v563
    %581 = vmatpush.msra.mxu0 %v562
    %582 = vmatmul.f32.gmra.mxu0 %v540
    %v583 = vpop.f32.mrf.mxu0
    %v584 = vadd.f32 %v565, %v583
    %585 = vdwg.mxu0
    %v586 = vmax.f32 %v584, 0.0
    %v587 = vld [vmem:[#allocation2 + $0x810] sm:$0xff]
    %v588 = vld [vmem:[#allocation2 + $0x818] sm:$0xff]
    %v589 = vld [vmem:[#allocation2 + $0x820] sm:$0xff]
    %v590 = vld [vmem:[#allocation2 + $0x828] sm:$0xff]
    %v591 = vld [vmem:[#allocation2 + $0x830] sm:$0xff]
    %v592 = vld [vmem:[#allocation2 + $0x838] sm:$0xff]
    %v593 = vld [vmem:[#allocation2 + $0x840] sm:$0xff]
    %v594 = vld [vmem:[#allocation2 + $0x848] sm:$0xff]
    %v595 = vld [vmem:[#allocation2 + $0x850] sm:$0xff]
    %v596 = vld [vmem:[#allocation2 + $0x858] sm:$0xff]
    %v597 = vld [vmem:[#allocation2 + $0x860] sm:$0xff]
    %v598 = vld [vmem:[#allocation2 + $0x868] sm:$0xff]
    %v599 = vld [vmem:[#allocation2 + $0x870] sm:$0xff]
    %v600 = vld [vmem:[#allocation2 + $0x878] sm:$0xff]
    %v601 = vld [vmem:[#allocation2 + $0x880] sm:$0xff]
    %v602 = vld [vmem:[#allocation2 + $0x888] sm:$0xff]
    %v603 = vld [vmem:[#allocation2 + $0x890] sm:$0x1]
    %v604 = vperm.slane %v603, 0
    %605 = vmatpush.msra.mxu0 %v602
    %606 = vmatpush.msra.mxu0 %v601
    %607 = vmatpush.msra.mxu0 %v600
    %608 = vmatpush.msra.mxu0 %v599
    %609 = vmatpush.msra.mxu0 %v598
    %610 = vmatpush.msra.mxu0 %v597
    %611 = vmatpush.msra.mxu0 %v596
    %612 = vmatpush.msra.mxu0 %v595
    %613 = vmatpush.msra.mxu0 %v594
    %614 = vmatpush.msra.mxu0 %v593
    %615 = vmatpush.msra.mxu0 %v592
    %616 = vmatpush.msra.mxu0 %v591
    %617 = vmatpush.msra.mxu0 %v590
    %618 = vmatpush.msra.mxu0 %v589
    %619 = vmatpush.msra.mxu0 %v588
    %620 = vmatpush.msra.mxu0 %v587
    %621 = vmatmul.f32.gmra.mxu0 %v586
    %v622 = vpop.f32.mrf.mxu0
    %v623 = vadd.f32 %v604, %v622
    %624 = vdwg.mxu0
    %v625 = vmul.f32 %v496, 2.5
    %v626 = vld [vmem:[#allocation2 + $0x6f8] sm:$0xff]
    %v627 = vld [vmem:[#allocation2 + $0x700] sm:$0xff]
    %v628 = vld [vmem:[#allocation2 + $0x708] sm:$0xff]
    %v629 = vld [vmem:[#allocation2 + $0x710] sm:$0xff]
    %v630 = vld [vmem:[#allocation2 + $0x718] sm:$0xff]
    %v631 = vld [vmem:[#allocation2 + $0x720] sm:$0xff]
    %v632 = vld [vmem:[#allocation2 + $0x728] sm:$0xff]
    %v633 = vld [vmem:[#allocation2 + $0x730] sm:$0xff]
    %v634 = vld [vmem:[#allocation2 + $0x738] sm:$0xff]
    %v635 = vld [vmem:[#allocation2 + $0x740] sm:$0xff]
    %v636 = vld [vmem:[#allocation2 + $0x748] sm:$0xff]
    %v637 = vld [vmem:[#allocation2 + $0x750] sm:$0xff]
    %v638 = vld [vmem:[#allocation2 + $0x758] sm:$0xff]
    %v639 = vld [vmem:[#allocation2 + $0x760] sm:$0xff]
    %v640 = vld [vmem:[#allocation2 + $0x768] sm:$0xff]
    %v641 = vld [vmem:[#allocation2 + $0x770] sm:$0xff]
    %642 = vmatpush.msra.mxu0 %v641
    %643 = vmatpush.msra.mxu0 %v640
    %644 = vmatpush.msra.mxu0 %v639
    %645 = vmatpush.msra.mxu0 %v638
    %646 = vmatpush.msra.mxu0 %v637
    %647 = vmatpush.msra.mxu0 %v636
    %648 = vmatpush.msra.mxu0 %v635
    %649 = vmatpush.msra.mxu0 %v634
    %650 = vmatpush.msra.mxu0 %v633
    %651 = vmatpush.msra.mxu0 %v632
    %652 = vmatpush.msra.mxu0 %v631
    %653 = vmatpush.msra.mxu0 %v630
    %654 = vmatpush.msra.mxu0 %v629
    %655 = vmatpush.msra.mxu0 %v628
    %656 = vmatpush.msra.mxu0 %v627
    %657 = vmatpush.msra.mxu0 %v626
    %658 = vmatmul.f32.gmra.mxu0 %v32
    %v659 = vpop.f32.mrf.mxu0
    %v660 = vadd.f32 0.0, %v659
    %661 = vdwg.mxu0
    %v662 = vld [vmem:[#allocation2 + $0x5d0] sm:$0xff]
    %v663 = vld [vmem:[#allocation2 + $0x5d8] sm:$0xff]
    %v664 = vld [vmem:[#allocation2 + $0x5e0] sm:$0xff]
    %v665 = vld [vmem:[#allocation2 + $0x5e8] sm:$0xff]
    %v666 = vld [vmem:[#allocation2 + $0x5f0] sm:$0xff]
    %v667 = vld [vmem:[#allocation2 + $0x5f8] sm:$0xff]
    %v668 = vld [vmem:[#allocation2 + $0x600] sm:$0xff]
    %v669 = vld [vmem:[#allocation2 + $0x608] sm:$0xff]
    %v670 = vld [vmem:[#allocation2 + $0x610] sm:$0xff]
    %v671 = vld [vmem:[#allocation2 + $0x618] sm:$0xff]
    %v672 = vld [vmem:[#allocation2 + $0x620] sm:$0xff]
    %v673 = vld [vmem:[#allocation2 + $0x628] sm:$0xff]
    %v674 = vld [vmem:[#allocation2 + $0x630] sm:$0xff]
    %v675 = vld [vmem:[#allocation2 + $0x638] sm:$0xff]
    %v676 = vld [vmem:[#allocation2 + $0x640] sm:$0xff]
    %v677 = vld [vmem:[#allocation2 + $0x648] sm:$0xff]
    %v678 = vld [vmem:[#allocation2 + $0x670] sm:$0xff]
    %v679 = vld [vmem:[#allocation2 + $0x678] sm:$0xff]
    %v680 = vld [vmem:[#allocation2 + $0x680] sm:$0xff]
    %v681 = vld [vmem:[#allocation2 + $0x688] sm:$0xff]
    %v682 = vld [vmem:[#allocation2 + $0x690] sm:$0xff]
    %v683 = vld [vmem:[#allocation2 + $0x698] sm:$0xff]
    %v684 = vld [vmem:[#allocation2 + $0x6a0] sm:$0xff]
    %v685 = vld [vmem:[#allocation2 + $0x6a8] sm:$0xff]
    %v686 = vld [vmem:[#allocation2 + $0x6b0] sm:$0xff]
    %v687 = vld [vmem:[#allocation2 + $0x6b8] sm:$0xff]
    %v688 = vld [vmem:[#allocation2 + $0x6c0] sm:$0xff]
    %v689 = vld [vmem:[#allocation2 + $0x6c8] sm:$0xff]
    %v690 = vld [vmem:[#allocation2 + $0x6d0] sm:$0xff]
    %v691 = vld [vmem:[#allocation2 + $0x6d8] sm:$0xff]
    %v692 = vld [vmem:[#allocation2 + $0x6e0] sm:$0xff]
    %v693 = vld [vmem:[#allocation2 + $0x6e8] sm:$0xff]
    %v694 = vld [vmem:[#allocation2 + $0x6f0] sm:$0x1]
    %vm695 = vcmp.lt.s32.totalorder %v459, 16
    %v696 = vld [vmem:[#allocation2 + $0x660] sm:$0x1]
    %697 = vmatpush.msra.mxu0 %v677
    %698 = vmatpush.msra.mxu0 %v676
    %699 = vmatpush.msra.mxu0 %v675
    %700 = vmatpush.msra.mxu0 %v674
    %701 = vmatpush.msra.mxu0 %v673
    %702 = vmatpush.msra.mxu0 %v672
    %703 = vmatpush.msra.mxu0 %v671
    %704 = vmatpush.msra.mxu0 %v670
    %705 = vmatpush.msra.mxu0 %v669
    %706 = vmatpush.msra.mxu0 %v668
    %707 = vmatpush.msra.mxu0 %v667
    %708 = vmatpush.msra.mxu0 %v666
    %709 = vmatpush.msra.mxu0 %v665
    %710 = vmatpush.msra.mxu0 %v664
    %711 = vmatpush.msra.mxu0 %v663
    %712 = vmatpush.msra.mxu0 %v662
    %713 = vmatmul.f32.gmra.mxu0 %v660
    %v714 = vpop.f32.mrf.mxu0
    %v715 = vadd.f32 %v560, %v714
    %716 = vdwg.mxu0
    %v717 = vperm.slane %v696, 0
    %v718 = vadd.f32 %v715, %v717
    %v719 = vsel %vm695, %v718, 0.0
    %721 = vset.pattern.permute.xlu0 16
    %722 = vperm.xlu0 %721, %v625
    %v723 = vpop.permute.xlu0 %722
    %v725 = vmul.f32 %v723, %v719
    %v726 = vadd.f32 %v660, %v725
    %v727 = vmax.f32 %v718, 0.0
    %728 = vmatpush.msra.mxu0 %v693
    %729 = vmatpush.msra.mxu0 %v692
    %730 = vmatpush.msra.mxu0 %v691
    %731 = vmatpush.msra.mxu0 %v690
    %732 = vmatpush.msra.mxu0 %v689
    %733 = vmatpush.msra.mxu0 %v688
    %734 = vmatpush.msra.mxu0 %v687
    %735 = vmatpush.msra.mxu0 %v686
    %736 = vmatpush.msra.mxu0 %v685
    %737 = vmatpush.msra.mxu0 %v684
    %738 = vmatpush.msra.mxu0 %v683
    %739 = vmatpush.msra.mxu0 %v682
    %740 = vmatpush.msra.mxu0 %v681
    %741 = vmatpush.msra.mxu0 %v680
    %742 = vmatpush.msra.mxu0 %v679
    %743 = vmatpush.msra.mxu0 %v678
    %744 = vmatmul.f32.gmra.mxu0 %v727
    %v745 = vpop.f32.mrf.mxu0
    %v746 = vadd.f32 0.0, %v745
    %747 = vdwg.mxu0
    %v748 = vadd.f32 %v726, %v746
    %v749 = vperm.slane %v694, 0
    %v750 = vadd.f32 %v748, %v749
    %v751 = vld [vmem:[#allocation2 + $0x661] sm:$0x1]
    %752 = vmatpush.msra.mxu0 %v677
    %753 = vmatpush.msra.mxu0 %v676
    %754 = vmatpush.msra.mxu0 %v675
    %755 = vmatpush.msra.mxu0 %v674
    %756 = vmatpush.msra.mxu0 %v673
    %757 = vmatpush.msra.mxu0 %v672
    %758 = vmatpush.msra.mxu0 %v671
    %759 = vmatpush.msra.mxu0 %v670
    %760 = vmatpush.msra.mxu0 %v669
    %761 = vmatpush.msra.mxu0 %v668
    %762 = vmatpush.msra.mxu0 %v667
    %763 = vmatpush.msra.mxu0 %v666
    %764 = vmatpush.msra.mxu0 %v665
    %765 = vmatpush.msra.mxu0 %v664
    %766 = vmatpush.msra.mxu0 %v663
    %767 = vmatpush.msra.mxu0 %v662
    %768 = vmatmul.f32.gmra.mxu0 %v750
    %v769 = vpop.f32.mrf.mxu0
    %v770 = vadd.f32 %v560, %v769
    %771 = vdwg.mxu0
    %v772 = vperm.slane %v751, 0
    %v773 = vadd.f32 %v770, %v772
    %v774 = vsel %vm695, %v773, 0.0
    %v775 = vmul.f32 %v723, %v774
    %v776 = vadd.f32 %v750, %v775
    %v777 = vmax.f32 %v773, 0.0
    %778 = vmatpush.msra.mxu0 %v693
    %779 = vmatpush.msra.mxu0 %v692
    %780 = vmatpush.msra.mxu0 %v691
    %781 = vmatpush.msra.mxu0 %v690
    %782 = vmatpush.msra.mxu0 %v689
    %783 = vmatpush.msra.mxu0 %v688
    %784 = vmatpush.msra.mxu0 %v687
    %785 = vmatpush.msra.mxu0 %v686
    %786 = vmatpush.msra.mxu0 %v685
    %787 = vmatpush.msra.mxu0 %v684
    %788 = vmatpush.msra.mxu0 %v683
    %789 = vmatpush.msra.mxu0 %v682
    %790 = vmatpush.msra.mxu0 %v681
    %791 = vmatpush.msra.mxu0 %v680
    %792 = vmatpush.msra.mxu0 %v679
    %793 = vmatpush.msra.mxu0 %v678
    %794 = vmatmul.f32.gmra.mxu0 %v777
    %v795 = vpop.f32.mrf.mxu0
    %v796 = vadd.f32 0.0, %v795
    %797 = vdwg.mxu0
    %v798 = vadd.f32 %v776, %v796
    %v799 = vadd.f32 %v798, %v749
    %v800 = vld [vmem:[#allocation2 + $0x662] sm:$0x1]
    %801 = vmatpush.msra.mxu0 %v677
    %802 = vmatpush.msra.mxu0 %v676
    %803 = vmatpush.msra.mxu0 %v675
    %804 = vmatpush.msra.mxu0 %v674
    %805 = vmatpush.msra.mxu0 %v673
    %806 = vmatpush.msra.mxu0 %v672
    %807 = vmatpush.msra.mxu0 %v671
    %808 = vmatpush.msra.mxu0 %v670
    %809 = vmatpush.msra.mxu0 %v669
    %810 = vmatpush.msra.mxu0 %v668
    %811 = vmatpush.msra.mxu0 %v667
    %812 = vmatpush.msra.mxu0 %v666
    %813 = vmatpush.msra.mxu0 %v665
    %814 = vmatpush.msra.mxu0 %v664
    %815 = vmatpush.msra.mxu0 %v663
    %816 = vmatpush.msra.mxu0 %v662
    %817 = vmatmul.f32.gmra.mxu0 %v799
    %v818 = vpop.f32.mrf.mxu0
    %v819 = vadd.f32 %v560, %v818
    %820 = vdwg.mxu0
    %v821 = vperm.slane %v800, 0
    %v822 = vadd.f32 %v819, %v821
    %v823 = vsel %vm695, %v822, 0.0
    %v824 = vmul.f32 %v723, %v823
    %v825 = vadd.f32 %v799, %v824
    %v826 = vmax.f32 %v822, 0.0
    %827 = vmatpush.msra.mxu0 %v693
    %828 = vmatpush.msra.mxu0 %v692
    %829 = vmatpush.msra.mxu0 %v691
    %830 = vmatpush.msra.mxu0 %v690
    %831 = vmatpush.msra.mxu0 %v689
    %832 = vmatpush.msra.mxu0 %v688
    %833 = vmatpush.msra.mxu0 %v687
    %834 = vmatpush.msra.mxu0 %v686
    %835 = vmatpush.msra.mxu0 %v685
    %836 = vmatpush.msra.mxu0 %v684
    %837 = vmatpush.msra.mxu0 %v683
    %838 = vmatpush.msra.mxu0 %v682
    %839 = vmatpush.msra.mxu0 %v681
    %840 = vmatpush.msra.mxu0 %v680
    %841 = vmatpush.msra.mxu0 %v679
    %842 = vmatpush.msra.mxu0 %v678
    %843 = vmatmul.f32.gmra.mxu0 %v826
    %v844 = vpop.f32.mrf.mxu0
    %v845 = vadd.f32 0.0, %v844
    %846 = vdwg.mxu0
    %v847 = vadd.f32 %v825, %v845
    %v848 = vadd.f32 %v847, %v749
    %v849 = vld [vmem:[#allocation2 + $0x663] sm:$0x1]
    %850 = vmatpush.msra.mxu0 %v677
    %851 = vmatpush.msra.mxu0 %v676
    %852 = vmatpush.msra.mxu0 %v675
    %853 = vmatpush.msra.mxu0 %v674
    %854 = vmatpush.msra.mxu0 %v673
    %855 = vmatpush.msra.mxu0 %v672
    %856 = vmatpush.msra.mxu0 %v671
    %857 = vmatpush.msra.mxu0 %v670
    %858 = vmatpush.msra.mxu0 %v669
    %859 = vmatpush.msra.mxu0 %v668
    %860 = vmatpush.msra.mxu0 %v667
    %861 = vmatpush.msra.mxu0 %v666
    %862 = vmatpush.msra.mxu0 %v665
    %863 = vmatpush.msra.mxu0 %v664
    %864 = vmatpush.msra.mxu0 %v663
    %865 = vmatpush.msra.mxu0 %v662
    %866 = vmatmul.f32.gmra.mxu0 %v848
    %v867 = vpop.f32.mrf.mxu0
    %v868 = vadd.f32 %v560, %v867
    %869 = vdwg.mxu0
    %v870 = vperm.slane %v849, 0
    %v871 = vadd.f32 %v868, %v870
    %v872 = vsel %vm695, %v871, 0.0
    %v873 = vmul.f32 %v723, %v872
    %v874 = vadd.f32 %v848, %v873
    %v875 = vmax.f32 %v871, 0.0
    %876 = vmatpush.msra.mxu0 %v693
    %877 = vmatpush.msra.mxu0 %v692
    %878 = vmatpush.msra.mxu0 %v691
    %879 = vmatpush.msra.mxu0 %v690
    %880 = vmatpush.msra.mxu0 %v689
    %881 = vmatpush.msra.mxu0 %v688
    %882 = vmatpush.msra.mxu0 %v687
    %883 = vmatpush.msra.mxu0 %v686
    %884 = vmatpush.msra.mxu0 %v685
    %885 = vmatpush.msra.mxu0 %v684
    %886 = vmatpush.msra.mxu0 %v683
    %887 = vmatpush.msra.mxu0 %v682
    %888 = vmatpush.msra.mxu0 %v681
    %889 = vmatpush.msra.mxu0 %v680
    %890 = vmatpush.msra.mxu0 %v679
    %891 = vmatpush.msra.mxu0 %v678
    %892 = vmatmul.f32.gmra.mxu0 %v875
    %v893 = vpop.f32.mrf.mxu0
    %v894 = vadd.f32 0.0, %v893
    %895 = vdwg.mxu0
    %v896 = vadd.f32 %v874, %v894
    %v897 = vadd.f32 %v896, %v749
    %v898 = vld [vmem:[#allocation2 + $0x664] sm:$0x1]
    %899 = vmatpush.msra.mxu0 %v677
    %900 = vmatpush.msra.mxu0 %v676
    %901 = vmatpush.msra.mxu0 %v675
    %902 = vmatpush.msra.mxu0 %v674
    %903 = vmatpush.msra.mxu0 %v673
    %904 = vmatpush.msra.mxu0 %v672
    %905 = vmatpush.msra.mxu0 %v671
    %906 = vmatpush.msra.mxu0 %v670
    %907 = vmatpush.msra.mxu0 %v669
    %908 = vmatpush.msra.mxu0 %v668
    %909 = vmatpush.msra.mxu0 %v667
    %910 = vmatpush.msra.mxu0 %v666
    %911 = vmatpush.msra.mxu0 %v665
    %912 = vmatpush.msra.mxu0 %v664
    %913 = vmatpush.msra.mxu0 %v663
    %914 = vmatpush.msra.mxu0 %v662
    %915 = vmatmul.f32.gmra.mxu0 %v897
    %v916 = vpop.f32.mrf.mxu0
    %v917 = vadd.f32 %v560, %v916
    %918 = vdwg.mxu0
    %v919 = vperm.slane %v898, 0
    %v920 = vadd.f32 %v917, %v919
    %v921 = vsel %vm695, %v920, 0.0
    %v922 = vmul.f32 %v723, %v921
    %v923 = vadd.f32 %v897, %v922
    %v924 = vmax.f32 %v920, 0.0
    %925 = vmatpush.msra.mxu0 %v693
    %926 = vmatpush.msra.mxu0 %v692
    %927 = vmatpush.msra.mxu0 %v691
    %928 = vmatpush.msra.mxu0 %v690
    %929 = vmatpush.msra.mxu0 %v689
    %930 = vmatpush.msra.mxu0 %v688
    %931 = vmatpush.msra.mxu0 %v687
    %932 = vmatpush.msra.mxu0 %v686
    %933 = vmatpush.msra.mxu0 %v685
    %934 = vmatpush.msra.mxu0 %v684
    %935 = vmatpush.msra.mxu0 %v683
    %936 = vmatpush.msra.mxu0 %v682
    %937 = vmatpush.msra.mxu0 %v681
    %938 = vmatpush.msra.mxu0 %v680
    %939 = vmatpush.msra.mxu0 %v679
    %940 = vmatpush.msra.mxu0 %v678
    %941 = vmatmul.f32.gmra.mxu0 %v924
    %v942 = vpop.f32.mrf.mxu0
    %v943 = vadd.f32 0.0, %v942
    %944 = vdwg.mxu0
    %v945 = vadd.f32 %v923, %v943
    %v946 = vadd.f32 %v945, %v749
    %v947 = vld [vmem:[#allocation2 + $0x665] sm:$0x1]
    %948 = vmatpush.msra.mxu0 %v677
    %949 = vmatpush.msra.mxu0 %v676
    %950 = vmatpush.msra.mxu0 %v675
    %951 = vmatpush.msra.mxu0 %v674
    %952 = vmatpush.msra.mxu0 %v673
    %953 = vmatpush.msra.mxu0 %v672
    %954 = vmatpush.msra.mxu0 %v671
    %955 = vmatpush.msra.mxu0 %v670
    %956 = vmatpush.msra.mxu0 %v669
    %957 = vmatpush.msra.mxu0 %v668
    %958 = vmatpush.msra.mxu0 %v667
    %959 = vmatpush.msra.mxu0 %v666
    %960 = vmatpush.msra.mxu0 %v665
    %961 = vmatpush.msra.mxu0 %v664
    %962 = vmatpush.msra.mxu0 %v663
    %963 = vmatpush.msra.mxu0 %v662
    %964 = vmatmul.f32.gmra.mxu0 %v946
    %v965 = vpop.f32.mrf.mxu0
    %v966 = vadd.f32 %v560, %v965
    %967 = vdwg.mxu0
    %v968 = vperm.slane %v947, 0
    %v969 = vadd.f32 %v966, %v968
    %v970 = vsel %vm695, %v969, 0.0
    %v971 = vmul.f32 %v723, %v970
    %v972 = vadd.f32 %v946, %v971
    %v973 = vmax.f32 %v969, 0.0
    %974 = vmatpush.msra.mxu0 %v693
    %975 = vmatpush.msra.mxu0 %v692
    %976 = vmatpush.msra.mxu0 %v691
    %977 = vmatpush.msra.mxu0 %v690
    %978 = vmatpush.msra.mxu0 %v689
    %979 = vmatpush.msra.mxu0 %v688
    %980 = vmatpush.msra.mxu0 %v687
    %981 = vmatpush.msra.mxu0 %v686
    %982 = vmatpush.msra.mxu0 %v685
    %983 = vmatpush.msra.mxu0 %v684
    %984 = vmatpush.msra.mxu0 %v683
    %985 = vmatpush.msra.mxu0 %v682
    %986 = vmatpush.msra.mxu0 %v681
    %987 = vmatpush.msra.mxu0 %v680
    %988 = vmatpush.msra.mxu0 %v679
    %989 = vmatpush.msra.mxu0 %v678
    %990 = vmatmul.f32.gmra.mxu0 %v973
    %v991 = vpop.f32.mrf.mxu0
    %v992 = vadd.f32 0.0, %v991
    %993 = vdwg.mxu0
    %v994 = vadd.f32 %v972, %v992
    %v995 = vadd.f32 %v994, %v749
    %v996 = vld [vmem:[#allocation2 + $0x666] sm:$0x1]
    %997 = vmatpush.msra.mxu0 %v677
    %998 = vmatpush.msra.mxu0 %v676
    %999 = vmatpush.msra.mxu0 %v675
    %1000 = vmatpush.msra.mxu0 %v674
    %1001 = vmatpush.msra.mxu0 %v673
    %1002 = vmatpush.msra.mxu0 %v672
    %1003 = vmatpush.msra.mxu0 %v671
    %1004 = vmatpush.msra.mxu0 %v670
    %1005 = vmatpush.msra.mxu0 %v669
    %1006 = vmatpush.msra.mxu0 %v668
    %1007 = vmatpush.msra.mxu0 %v667
    %1008 = vmatpush.msra.mxu0 %v666
    %1009 = vmatpush.msra.mxu0 %v665
    %1010 = vmatpush.msra.mxu0 %v664
    %1011 = vmatpush.msra.mxu0 %v663
    %1012 = vmatpush.msra.mxu0 %v662
    %1013 = vmatmul.f32.gmra.mxu0 %v995
    %v1014 = vpop.f32.mrf.mxu0
    %v1015 = vadd.f32 %v560, %v1014
    %1016 = vdwg.mxu0
    %v1017 = vperm.slane %v996, 0
    %v1018 = vadd.f32 %v1015, %v1017
    %v1019 = vsel %vm695, %v1018, 0.0
    %v1020 = vmul.f32 %v723, %v1019
    %v1021 = vadd.f32 %v995, %v1020
    %v1022 = vmax.f32 %v1018, 0.0
    %1023 = vmatpush.msra.mxu0 %v693
    %1024 = vmatpush.msra.mxu0 %v692
    %1025 = vmatpush.msra.mxu0 %v691
    %1026 = vmatpush.msra.mxu0 %v690
    %1027 = vmatpush.msra.mxu0 %v689
    %1028 = vmatpush.msra.mxu0 %v688
    %1029 = vmatpush.msra.mxu0 %v687
    %1030 = vmatpush.msra.mxu0 %v686
    %1031 = vmatpush.msra.mxu0 %v685
    %1032 = vmatpush.msra.mxu0 %v684
    %1033 = vmatpush.msra.mxu0 %v683
    %1034 = vmatpush.msra.mxu0 %v682
    %1035 = vmatpush.msra.mxu0 %v681
    %1036 = vmatpush.msra.mxu0 %v680
    %1037 = vmatpush.msra.mxu0 %v679
    %1038 = vmatpush.msra.mxu0 %v678
    %1039 = vmatmul.f32.gmra.mxu0 %v1022
    %v1040 = vpop.f32.mrf.mxu0
    %v1041 = vadd.f32 0.0, %v1040
    %1042 = vdwg.mxu0
    %v1043 = vadd.f32 %v1021, %v1041
    %v1044 = vadd.f32 %v1043, %v749
    %v1045 = vld [vmem:[#allocation2 + $0x667] sm:$0x1]
    %1046 = vmatpush.msra.mxu0 %v677
    %1047 = vmatpush.msra.mxu0 %v676
    %1048 = vmatpush.msra.mxu0 %v675
    %1049 = vmatpush.msra.mxu0 %v674
    %1050 = vmatpush.msra.mxu0 %v673
    %1051 = vmatpush.msra.mxu0 %v672
    %1052 = vmatpush.msra.mxu0 %v671
    %1053 = vmatpush.msra.mxu0 %v670
    %1054 = vmatpush.msra.mxu0 %v669
    %1055 = vmatpush.msra.mxu0 %v668
    %1056 = vmatpush.msra.mxu0 %v667
    %1057 = vmatpush.msra.mxu0 %v666
    %1058 = vmatpush.msra.mxu0 %v665
    %1059 = vmatpush.msra.mxu0 %v664
    %1060 = vmatpush.msra.mxu0 %v663
    %1061 = vmatpush.msra.mxu0 %v662
    %1062 = vmatmul.f32.gmra.mxu0 %v1044
    %v1063 = vpop.f32.mrf.mxu0
    %v1064 = vadd.f32 %v560, %v1063
    %1065 = vdwg.mxu0
    %v1066 = vperm.slane %v1045, 0
    %v1067 = vadd.f32 %v1064, %v1066
    %v1068 = vsel %vm695, %v1067, 0.0
    %v1069 = vmul.f32 %v723, %v1068
    %v1070 = vadd.f32 %v1044, %v1069
    %v1071 = vmax.f32 %v1067, 0.0
    %1072 = vmatpush.msra.mxu0 %v693
    %1073 = vmatpush.msra.mxu0 %v692
    %1074 = vmatpush.msra.mxu0 %v691
    %1075 = vmatpush.msra.mxu0 %v690
    %1076 = vmatpush.msra.mxu0 %v689
    %1077 = vmatpush.msra.mxu0 %v688
    %1078 = vmatpush.msra.mxu0 %v687
    %1079 = vmatpush.msra.mxu0 %v686
    %1080 = vmatpush.msra.mxu0 %v685
    %1081 = vmatpush.msra.mxu0 %v684
    %1082 = vmatpush.msra.mxu0 %v683
    %1083 = vmatpush.msra.mxu0 %v682
    %1084 = vmatpush.msra.mxu0 %v681
    %1085 = vmatpush.msra.mxu0 %v680
    %1086 = vmatpush.msra.mxu0 %v679
    %1087 = vmatpush.msra.mxu0 %v678
    %1088 = vmatmul.f32.gmra.mxu0 %v1071
    %v1089 = vpop.f32.mrf.mxu0
    %v1090 = vadd.f32 0.0, %v1089
    %1091 = vdwg.mxu0
    %v1092 = vadd.f32 %v1070, %v1090
    %v1093 = vadd.f32 %v1092, %v749
    %v1094 = vld [vmem:[#allocation2 + $0x668] sm:$0x1]
    %1095 = vmatpush.msra.mxu0 %v677
    %1096 = vmatpush.msra.mxu0 %v676
    %1097 = vmatpush.msra.mxu0 %v675
    %1098 = vmatpush.msra.mxu0 %v674
    %1099 = vmatpush.msra.mxu0 %v673
    %1100 = vmatpush.msra.mxu0 %v672
    %1101 = vmatpush.msra.mxu0 %v671
    %1102 = vmatpush.msra.mxu0 %v670
    %1103 = vmatpush.msra.mxu0 %v669
    %1104 = vmatpush.msra.mxu0 %v668
    %1105 = vmatpush.msra.mxu0 %v667
    %1106 = vmatpush.msra.mxu0 %v666
    %1107 = vmatpush.msra.mxu0 %v665
    %1108 = vmatpush.msra.mxu0 %v664
    %1109 = vmatpush.msra.mxu0 %v663
    %1110 = vmatpush.msra.mxu0 %v662
    %1111 = vmatmul.f32.gmra.mxu0 %v1093
    %v1112 = vpop.f32.mrf.mxu0
    %v1113 = vadd.f32 %v560, %v1112
    %1114 = vdwg.mxu0
    %v1115 = vperm.slane %v1094, 0
    %v1116 = vadd.f32 %v1113, %v1115
    %v1117 = vsel %vm695, %v1116, 0.0
    %v1118 = vmul.f32 %v723, %v1117
    %v1119 = vadd.f32 %v1093, %v1118
    %v1120 = vmax.f32 %v1116, 0.0
    %1121 = vmatpush.msra.mxu0 %v693
    %1122 = vmatpush.msra.mxu0 %v692
    %1123 = vmatpush.msra.mxu0 %v691
    %1124 = vmatpush.msra.mxu0 %v690
    %1125 = vmatpush.msra.mxu0 %v689
    %1126 = vmatpush.msra.mxu0 %v688
    %1127 = vmatpush.msra.mxu0 %v687
    %1128 = vmatpush.msra.mxu0 %v686
    %1129 = vmatpush.msra.mxu0 %v685
    %1130 = vmatpush.msra.mxu0 %v684
    %1131 = vmatpush.msra.mxu0 %v683
    %1132 = vmatpush.msra.mxu0 %v682
    %1133 = vmatpush.msra.mxu0 %v681
    %1134 = vmatpush.msra.mxu0 %v680
    %1135 = vmatpush.msra.mxu0 %v679
    %1136 = vmatpush.msra.mxu0 %v678
    %1137 = vmatmul.f32.gmra.mxu0 %v1120
    %v1138 = vpop.f32.mrf.mxu0
    %v1139 = vadd.f32 0.0, %v1138
    %1140 = vdwg.mxu0
    %v1141 = vadd.f32 %v1119, %v1139
    %v1142 = vadd.f32 %v1141, %v749
    %v1143 = vld [vmem:[#allocation2 + $0x669] sm:$0x1]
    %1144 = vmatpush.msra.mxu0 %v677
    %1145 = vmatpush.msra.mxu0 %v676
    %1146 = vmatpush.msra.mxu0 %v675
    %1147 = vmatpush.msra.mxu0 %v674
    %1148 = vmatpush.msra.mxu0 %v673
    %1149 = vmatpush.msra.mxu0 %v672
    %1150 = vmatpush.msra.mxu0 %v671
    %1151 = vmatpush.msra.mxu0 %v670
    %1152 = vmatpush.msra.mxu0 %v669
    %1153 = vmatpush.msra.mxu0 %v668
    %1154 = vmatpush.msra.mxu0 %v667
    %1155 = vmatpush.msra.mxu0 %v666
    %1156 = vmatpush.msra.mxu0 %v665
    %1157 = vmatpush.msra.mxu0 %v664
    %1158 = vmatpush.msra.mxu0 %v663
    %1159 = vmatpush.msra.mxu0 %v662
    %1160 = vmatmul.f32.gmra.mxu0 %v1142
    %v1161 = vpop.f32.mrf.mxu0
    %v1162 = vadd.f32 %v560, %v1161
    %1163 = vdwg.mxu0
    %v1164 = vperm.slane %v1143, 0
    %v1165 = vadd.f32 %v1162, %v1164
    %v1166 = vsel %vm695, %v1165, 0.0
    %v1167 = vmul.f32 %v723, %v1166
    %v1168 = vadd.f32 %v1142, %v1167
    %v1169 = vmax.f32 %v1165, 0.0
    %1170 = vmatpush.msra.mxu0 %v693
    %1171 = vmatpush.msra.mxu0 %v692
    %1172 = vmatpush.msra.mxu0 %v691
    %1173 = vmatpush.msra.mxu0 %v690
    %1174 = vmatpush.msra.mxu0 %v689
    %1175 = vmatpush.msra.mxu0 %v688
    %1176 = vmatpush.msra.mxu0 %v687
    %1177 = vmatpush.msra.mxu0 %v686
    %1178 = vmatpush.msra.mxu0 %v685
    %1179 = vmatpush.msra.mxu0 %v684
    %1180 = vmatpush.msra.mxu0 %v683
    %1181 = vmatpush.msra.mxu0 %v682
    %1182 = vmatpush.msra.mxu0 %v681
    %1183 = vmatpush.msra.mxu0 %v680
    %1184 = vmatpush.msra.mxu0 %v679
    %1185 = vmatpush.msra.mxu0 %v678
    %1186 = vmatmul.f32.gmra.mxu0 %v1169
    %v1187 = vpop.f32.mrf.mxu0
    %v1188 = vadd.f32 0.0, %v1187
    %1189 = vdwg.mxu0
    %v1190 = vadd.f32 %v1168, %v1188
    %v1191 = vadd.f32 %v1190, %v749
    %v1192 = vld [vmem:[#allocation2 + $0x66a] sm:$0x1]
    %1193 = vmatpush.msra.mxu0 %v677
    %1194 = vmatpush.msra.mxu0 %v676
    %1195 = vmatpush.msra.mxu0 %v675
    %1196 = vmatpush.msra.mxu0 %v674
    %1197 = vmatpush.msra.mxu0 %v673
    %1198 = vmatpush.msra.mxu0 %v672
    %1199 = vmatpush.msra.mxu0 %v671
    %1200 = vmatpush.msra.mxu0 %v670
    %1201 = vmatpush.msra.mxu0 %v669
    %1202 = vmatpush.msra.mxu0 %v668
    %1203 = vmatpush.msra.mxu0 %v667
    %1204 = vmatpush.msra.mxu0 %v666
    %1205 = vmatpush.msra.mxu0 %v665
    %1206 = vmatpush.msra.mxu0 %v664
    %1207 = vmatpush.msra.mxu0 %v663
    %1208 = vmatpush.msra.mxu0 %v662
    %1209 = vmatmul.f32.gmra.mxu0 %v1191
    %v1210 = vpop.f32.mrf.mxu0
    %v1211 = vadd.f32 %v560, %v1210
    %1212 = vdwg.mxu0
    %v1213 = vperm.slane %v1192, 0
    %v1214 = vadd.f32 %v1211, %v1213
    %v1215 = vsel %vm695, %v1214, 0.0
    %v1216 = vmul.f32 %v723, %v1215
    %v1217 = vadd.f32 %v1191, %v1216
    %v1218 = vmax.f32 %v1214, 0.0
    %1219 = vmatpush.msra.mxu0 %v693
    %1220 = vmatpush.msra.mxu0 %v692
    %1221 = vmatpush.msra.mxu0 %v691
    %1222 = vmatpush.msra.mxu0 %v690
    %1223 = vmatpush.msra.mxu0 %v689
    %1224 = vmatpush.msra.mxu0 %v688
    %1225 = vmatpush.msra.mxu0 %v687
    %1226 = vmatpush.msra.mxu0 %v686
    %1227 = vmatpush.msra.mxu0 %v685
    %1228 = vmatpush.msra.mxu0 %v684
    %1229 = vmatpush.msra.mxu0 %v683
    %1230 = vmatpush.msra.mxu0 %v682
    %1231 = vmatpush.msra.mxu0 %v681
    %1232 = vmatpush.msra.mxu0 %v680
    %1233 = vmatpush.msra.mxu0 %v679
    %1234 = vmatpush.msra.mxu0 %v678
    %1235 = vmatmul.f32.gmra.mxu0 %v1218
    %v1236 = vpop.f32.mrf.mxu0
    %v1237 = vadd.f32 0.0, %v1236
    %1238 = vdwg.mxu0
    %v1239 = vadd.f32 %v1217, %v1237
    %v1240 = vadd.f32 %v1239, %v749
    %v1241 = vld [vmem:[#allocation2 + $0x66b] sm:$0x1]
    %1242 = vmatpush.msra.mxu0 %v677
    %1243 = vmatpush.msra.mxu0 %v676
    %1244 = vmatpush.msra.mxu0 %v675
    %1245 = vmatpush.msra.mxu0 %v674
    %1246 = vmatpush.msra.mxu0 %v673
    %1247 = vmatpush.msra.mxu0 %v672
    %1248 = vmatpush.msra.mxu0 %v671
    %1249 = vmatpush.msra.mxu0 %v670
    %1250 = vmatpush.msra.mxu0 %v669
    %1251 = vmatpush.msra.mxu0 %v668
    %1252 = vmatpush.msra.mxu0 %v667
    %1253 = vmatpush.msra.mxu0 %v666
    %1254 = vmatpush.msra.mxu0 %v665
    %1255 = vmatpush.msra.mxu0 %v664
    %1256 = vmatpush.msra.mxu0 %v663
    %1257 = vmatpush.msra.mxu0 %v662
    %1258 = vmatmul.f32.gmra.mxu0 %v1240
    %v1259 = vpop.f32.mrf.mxu0
    %v1260 = vadd.f32 %v560, %v1259
    %1261 = vdwg.mxu0
    %v1262 = vperm.slane %v1241, 0
    %v1263 = vadd.f32 %v1260, %v1262
    %v1264 = vsel %vm695, %v1263, 0.0
    %v1265 = vmul.f32 %v723, %v1264
    %v1266 = vadd.f32 %v1240, %v1265
    %v1267 = vmax.f32 %v1263, 0.0
    %1268 = vmatpush.msra.mxu0 %v693
    %1269 = vmatpush.msra.mxu0 %v692
    %1270 = vmatpush.msra.mxu0 %v691
    %1271 = vmatpush.msra.mxu0 %v690
    %1272 = vmatpush.msra.mxu0 %v689
    %1273 = vmatpush.msra.mxu0 %v688
    %1274 = vmatpush.msra.mxu0 %v687
    %1275 = vmatpush.msra.mxu0 %v686
    %1276 = vmatpush.msra.mxu0 %v685
    %1277 = vmatpush.msra.mxu0 %v684
    %1278 = vmatpush.msra.mxu0 %v683
    %1279 = vmatpush.msra.mxu0 %v682
    %1280 = vmatpush.msra.mxu0 %v681
    %1281 = vmatpush.msra.mxu0 %v680
    %1282 = vmatpush.msra.mxu0 %v679
    %1283 = vmatpush.msra.mxu0 %v678
    %1284 = vmatmul.f32.gmra.mxu0 %v1267
    %v1285 = vpop.f32.mrf.mxu0
    %v1286 = vadd.f32 0.0, %v1285
    %1287 = vdwg.mxu0
    %v1288 = vadd.f32 %v1266, %v1286
    %v1289 = vadd.f32 %v1288, %v749
    %v1290 = vld [vmem:[#allocation2 + $0x66c] sm:$0x1]
    %1291 = vmatpush.msra.mxu0 %v677
    %1292 = vmatpush.msra.mxu0 %v676
    %1293 = vmatpush.msra.mxu0 %v675
    %1294 = vmatpush.msra.mxu0 %v674
    %1295 = vmatpush.msra.mxu0 %v673
    %1296 = vmatpush.msra.mxu0 %v672
    %1297 = vmatpush.msra.mxu0 %v671
    %1298 = vmatpush.msra.mxu0 %v670
    %1299 = vmatpush.msra.mxu0 %v669
    %1300 = vmatpush.msra.mxu0 %v668
    %1301 = vmatpush.msra.mxu0 %v667
    %1302 = vmatpush.msra.mxu0 %v666
    %1303 = vmatpush.msra.mxu0 %v665
    %1304 = vmatpush.msra.mxu0 %v664
    %1305 = vmatpush.msra.mxu0 %v663
    %1306 = vmatpush.msra.mxu0 %v662
    %1307 = vmatmul.f32.gmra.mxu0 %v1289
    %v1308 = vpop.f32.mrf.mxu0
    %v1309 = vadd.f32 %v560, %v1308
    %1310 = vdwg.mxu0
    %v1311 = vperm.slane %v1290, 0
    %v1312 = vadd.f32 %v1309, %v1311
    %v1313 = vsel %vm695, %v1312, 0.0
    %v1314 = vmul.f32 %v723, %v1313
    %v1315 = vadd.f32 %v1289, %v1314
    %v1316 = vmax.f32 %v1312, 0.0
    %1317 = vmatpush.msra.mxu0 %v693
    %1318 = vmatpush.msra.mxu0 %v692
    %1319 = vmatpush.msra.mxu0 %v691
    %1320 = vmatpush.msra.mxu0 %v690
    %1321 = vmatpush.msra.mxu0 %v689
    %1322 = vmatpush.msra.mxu0 %v688
    %1323 = vmatpush.msra.mxu0 %v687
    %1324 = vmatpush.msra.mxu0 %v686
    %1325 = vmatpush.msra.mxu0 %v685
    %1326 = vmatpush.msra.mxu0 %v684
    %1327 = vmatpush.msra.mxu0 %v683
    %1328 = vmatpush.msra.mxu0 %v682
    %1329 = vmatpush.msra.mxu0 %v681
    %1330 = vmatpush.msra.mxu0 %v680
    %1331 = vmatpush.msra.mxu0 %v679
    %1332 = vmatpush.msra.mxu0 %v678
    %1333 = vmatmul.f32.gmra.mxu0 %v1316
    %v1334 = vpop.f32.mrf.mxu0
    %v1335 = vadd.f32 0.0, %v1334
    %1336 = vdwg.mxu0
    %v1337 = vadd.f32 %v1315, %v1335
    %v1338 = vadd.f32 %v1337, %v749
    %v1339 = vld [vmem:[#allocation2 + $0x66d] sm:$0x1]
    %1340 = vmatpush.msra.mxu0 %v677
    %1341 = vmatpush.msra.mxu0 %v676
    %1342 = vmatpush.msra.mxu0 %v675
    %1343 = vmatpush.msra.mxu0 %v674
    %1344 = vmatpush.msra.mxu0 %v673
    %1345 = vmatpush.msra.mxu0 %v672
    %1346 = vmatpush.msra.mxu0 %v671
    %1347 = vmatpush.msra.mxu0 %v670
    %1348 = vmatpush.msra.mxu0 %v669
    %1349 = vmatpush.msra.mxu0 %v668
    %1350 = vmatpush.msra.mxu0 %v667
    %1351 = vmatpush.msra.mxu0 %v666
    %1352 = vmatpush.msra.mxu0 %v665
    %1353 = vmatpush.msra.mxu0 %v664
    %1354 = vmatpush.msra.mxu0 %v663
    %1355 = vmatpush.msra.mxu0 %v662
    %1356 = vmatmul.f32.gmra.mxu0 %v1338
    %v1357 = vpop.f32.mrf.mxu0
    %v1358 = vadd.f32 %v560, %v1357
    %1359 = vdwg.mxu0
    %v1360 = vperm.slane %v1339, 0
    %v1361 = vadd.f32 %v1358, %v1360
    %v1362 = vsel %vm695, %v1361, 0.0
    %v1363 = vmul.f32 %v723, %v1362
    %v1364 = vadd.f32 %v1338, %v1363
    %v1365 = vmax.f32 %v1361, 0.0
    %1366 = vmatpush.msra.mxu0 %v693
    %1367 = vmatpush.msra.mxu0 %v692
    %1368 = vmatpush.msra.mxu0 %v691
    %1369 = vmatpush.msra.mxu0 %v690
    %1370 = vmatpush.msra.mxu0 %v689
    %1371 = vmatpush.msra.mxu0 %v688
    %1372 = vmatpush.msra.mxu0 %v687
    %1373 = vmatpush.msra.mxu0 %v686
    %1374 = vmatpush.msra.mxu0 %v685
    %1375 = vmatpush.msra.mxu0 %v684
    %1376 = vmatpush.msra.mxu0 %v683
    %1377 = vmatpush.msra.mxu0 %v682
    %1378 = vmatpush.msra.mxu0 %v681
    %1379 = vmatpush.msra.mxu0 %v680
    %1380 = vmatpush.msra.mxu0 %v679
    %1381 = vmatpush.msra.mxu0 %v678
    %1382 = vmatmul.f32.gmra.mxu0 %v1365
    %v1383 = vpop.f32.mrf.mxu0
    %v1384 = vadd.f32 0.0, %v1383
    %1385 = vdwg.mxu0
    %v1386 = vadd.f32 %v1364, %v1384
    %v1387 = vadd.f32 %v1386, %v749
    %1389 = vrot.lane.b32.xlu0 %v799, 16
    %v1390 = vpop.permute.xlu0 %1389
    %1393 = vrot.lane.b32.xlu0 %v897, 32
    %v1394 = vpop.permute.xlu0 %1393
    %1397 = vrot.lane.b32.xlu0 %v995, 48
    %v1398 = vpop.permute.xlu0 %1397
    %1401 = vrot.lane.b32.xlu0 %v1093, 64
    %v1402 = vpop.permute.xlu0 %1401
    %1405 = vrot.lane.b32.xlu0 %v1191, 80
    %v1406 = vpop.permute.xlu0 %1405
    %1409 = vrot.lane.b32.xlu0 %v1289, 96
    %v1410 = vpop.permute.xlu0 %1409
    %1413 = vrot.lane.b32.xlu0 %v1387, 112
    %v1414 = vpop.permute.xlu0 %1413
    %v1416 = vsel %vm538, %v660, %v1390
    %vm1417 = vcmask 261120
    %v1418 = vsel %vm1417, %v1416, %v1394
    %vm1419 = vcmask 392192
    %v1420 = vsel %vm1419, %v1418, %v1398
    %vm1421 = vcmask 523264
    %v1422 = vsel %vm1421, %v1420, %v1402
    %vm1423 = vcmask 654336
    %v1424 = vsel %vm1423, %v1422, %v1406
    %vm1425 = vcmask 785408
    %v1426 = vsel %vm1425, %v1424, %v1410
    %vm1427 = vcmask 916480
    %v1428 = vsel %vm1427, %v1426, %v1414
    %v1429 = vld [vmem:[#allocation2 + $0x778] sm:$0xff]
    %v1430 = vld [vmem:[#allocation2 + $0x780] sm:$0xff]
    %v1431 = vld [vmem:[#allocation2 + $0x788] sm:$0xff]
    %v1432 = vld [vmem:[#allocation2 + $0x790] sm:$0xff]
    %v1433 = vld [vmem:[#allocation2 + $0x798] sm:$0xff]
    %v1434 = vld [vmem:[#allocation2 + $0x7a0] sm:$0xff]
    %v1435 = vld [vmem:[#allocation2 + $0x7a8] sm:$0xff]
    %v1436 = vld [vmem:[#allocation2 + $0x7b0] sm:$0xff]
    %v1437 = vld [vmem:[#allocation2 + $0x7b8] sm:$0xff]
    %v1438 = vld [vmem:[#allocation2 + $0x7c0] sm:$0xff]
    %v1439 = vld [vmem:[#allocation2 + $0x7c8] sm:$0xff]
    %v1440 = vld [vmem:[#allocation2 + $0x7d0] sm:$0xff]
    %v1441 = vld [vmem:[#allocation2 + $0x7d8] sm:$0xff]
    %v1442 = vld [vmem:[#allocation2 + $0x7e0] sm:$0xff]
    %v1443 = vld [vmem:[#allocation2 + $0x7e8] sm:$0xff]
    %v1444 = vld [vmem:[#allocation2 + $0x7f0] sm:$0xff]
    %1445 = vmatpush.msra.mxu0 %v1444
    %1446 = vmatpush.msra.mxu0 %v1443
    %1447 = vmatpush.msra.mxu0 %v1442
    %1448 = vmatpush.msra.mxu0 %v1441
    %1449 = vmatpush.msra.mxu0 %v1440
    %1450 = vmatpush.msra.mxu0 %v1439
    %1451 = vmatpush.msra.mxu0 %v1438
    %1452 = vmatpush.msra.mxu0 %v1437
    %1453 = vmatpush.msra.mxu0 %v1436
    %1454 = vmatpush.msra.mxu0 %v1435
    %1455 = vmatpush.msra.mxu0 %v1434
    %1456 = vmatpush.msra.mxu0 %v1433
    %1457 = vmatpush.msra.mxu0 %v1432
    %1458 = vmatpush.msra.mxu0 %v1431
    %1459 = vmatpush.msra.mxu0 %v1430
    %1460 = vmatpush.msra.mxu0 %v1429
    %1461 = vmatmul.f32.gmra.mxu0 %v1428
    %v1462 = vpop.f32.mrf.mxu0
    %v1463 = vadd.f32 0.0, %v1462
    %1464 = vdwg.mxu0
    %v1465 = vadd.f32 %v623, %v1463
    %1466 = vst [vmem:[%s3] sm:$0xff] %v1465
    // Predicated region
    $region18: #{_lambda_.1} parent=1 // pred_check
      _
    $region19: #{_lambda_.1} parent=1 // pred_check_branch
      %1468 = sbr.rel (0) target = $region21
    $region20: #{_lambda_.1} parent=1 // pred_region
      _
    $region21: #{_lambda_.1} parent=1 // pred_fallthru
      _
    // Predicated region
    $region22: #{_lambda_.1} parent=1 // pred_check
      _
    $region23: #{_lambda_.1} parent=1 // pred_check_branch
      %1470 = sbr.rel (0) target = $region25
    $region24: #{_lambda_.1} parent=1 // pred_region
      _
    $region25: #{_lambda_.1} parent=1 // pred_fallthru
      _
    // Predicated region
    $region26: #{_lambda_.1} parent=1 // pred_check
      _
    $region27: #{_lambda_.1} parent=1 // pred_check_branch
      %1472 = sbr.rel (0) target = $region29
    $region28: #{_lambda_.1} parent=1 // pred_region
      _
    $region29: #{_lambda_.1} parent=1 // pred_fallthru
      _
    // Predicated region
    $region30: #{_lambda_.1} parent=1 // pred_check
      _
    $region31: #{_lambda_.1} parent=1 // pred_check_branch
      %1474 = sbr.rel (0) target = $region33
    $region32: #{_lambda_.1} parent=1 // pred_region
      _
    $region33: #{_lambda_.1} parent=1 // pred_fallthru
      _
    %1475 = vsyncpa [#allocation3], 1

</llo_original>
